<compile_context>
chip_gen: v6e
topology: v6e:2x2x1
jax: 0.10.0
libtpu: 0.0.40
codegen_flags: <defaults>
</compile_context>

<pallas_src>
import functools

import numpy as np
import jax
import jax.numpy as jnp
from jax.experimental import pallas as pl
from jax.experimental.pallas import tpu as pltpu

BN_EPS = 1e-5
MXU_DTYPE = jnp.bfloat16     # MXU operand dtype; accumulation / epilogue stay f32


def _basic_block_kernel(H, W, C,
                        x_ref, w1_ref, w2_ref, mask_ref,
                        s1_ref, b1_ref, s2_ref, b2_ref, out_ref):
    """Fused BasicBlock for one batch element (stride 1, pad 1), CHW layout.

    x_ref   : (1, C, S)   input, S = H*W on lanes, channels on sublanes (f32)
    w*_ref  : (9, C, C)   per-tap (Cout, Cin) conv weights, tap = ky*3 + kx (bf16)
    mask_ref: (9, 1, S)   0/1 edge-validity mask per tap (zero-padding semantics)
    s*/b*   : (C, 1)      folded BatchNorm scale / bias (f32)
    out_ref : (1, C, S)
    """
    S = H * W

    def conv3x3(x_cs, w_ref):
        # 9 tap-accumulated MXU matmuls: (Cout,Cin) @ (Cin,S) -> (Cout,S), f32 acc.
        # The spatial shift of each tap is a lane rotation (XLU) + edge mask (VPU);
        # nothing is staged through VMEM (no im2col buffer, no padded scratch).
        acc = None
        for dy in (-1, 0, 1):
            for dx in (-1, 0, 1):
                tap = (dy + 1) * 3 + (dx + 1)
                off = dy * W + dx
                if off == 0:
                    shifted = x_cs
                else:
                    # shifted[s] = x[s + off]; positions whose true 2-D neighbour is
                    # outside the image (incl. all roll wrap-arounds) are masked to 0.
                    shifted = pltpu.roll(x_cs, shift=(-off) % S, axis=1)
                    shifted = shifted * mask_ref[tap]
                p = jnp.dot(w_ref[tap], shifted.astype(MXU_DTYPE),
                            preferred_element_type=jnp.float32)
                acc = p if acc is None else acc + p
        return acc                                   # (C, S) float32

    # ---- conv1 -> BN1 -> ReLU (intermediate never leaves registers/VMEM) ----
    h = conv3x3(x_ref[0], w1_ref)
    h = jnp.maximum(h * s1_ref[...] + b1_ref[...], 0.0)

    # ---- conv2 -> BN2 -> +residual -> ReLU ----
    y = conv3x3(h, w2_ref)
    y = y * s2_ref[...] + b2_ref[...]
    y = y + x_ref[0]                                 # residual: re-read, short live range
    out_ref[0] = jnp.maximum(y, 0.0).astype(out_ref.dtype)


def _edge_masks(H, W):
    """(9, 1, H*W) 0/1 masks: validity of the (dy, dx)-shifted read (zero padding)."""
    h_idx = np.arange(H)[:, None]
    w_idx = np.arange(W)[None, :]
    masks = []
    for dy in (-1, 0, 1):
        for dx in (-1, 0, 1):
            valid = ((h_idx + dy >= 0) & (h_idx + dy < H) &
                     (w_idx + dx >= 0) & (w_idx + dx < W))
            masks.append(valid.reshape(1, H * W))
    return jnp.asarray(np.stack(masks), dtype=jnp.float32)      # (9, 1, S)


def basic_block_pallas(x_nchw, w1, w2, scale1, bias1, scale2, bias2):
    """Single fused pallas_call for the whole BasicBlock (stride=1, no downsample)."""
    N, C, H, W = x_nchw.shape
    S = H * W
    assert w1.shape == (3, 3, C, C) and w2.shape == (3, 3, C, C), (
        "BasicBlock kernel supports stride=1, downsample=None (inplanes==planes)")

    # HWIO (3,3,Ci,Co) -> per-tap (Co,Ci): (9, C, C), tap = ky*3 + kx (bf16 MXU operands).
    w1_t = jnp.transpose(w1, (0, 1, 3, 2)).reshape(9, C, C).astype(MXU_DTYPE)
    w2_t = jnp.transpose(w2, (0, 1, 3, 2)).reshape(9, C, C).astype(MXU_DTYPE)
    scale1 = scale1.reshape(C, 1).astype(jnp.float32)
    bias1 = bias1.reshape(C, 1).astype(jnp.float32)
    scale2 = scale2.reshape(C, 1).astype(jnp.float32)
    bias2 = bias2.reshape(C, 1).astype(jnp.float32)
    masks = _edge_masks(H, W)

    x_ncs = x_nchw.reshape(N, C, S)                  # NCHW -> (N, C, H*W): free reshape
    kernel = functools.partial(_basic_block_kernel, H, W, C)

    itemsize = x_nchw.dtype.itemsize
    cost = pl.CostEstimate(
        flops=2 * 2 * 9 * N * S * C * C,             # two 3x3 convs
        transcendentals=0,
        bytes_accessed=(2 * N * C * S * itemsize     # x in + out
                        + 2 * 9 * C * C * 2          # bf16 weights
                        + 9 * S * 4 + 4 * C * 4))    # edge masks + scale/bias

    out = pl.pallas_call(
        kernel,
        out_shape=jax.ShapeDtypeStruct((N, C, S), x_nchw.dtype),
        grid=(N,),                                   # one image per step; batch -> TCs
        in_specs=[
            pl.BlockSpec((1, C, S), lambda n: (n, 0, 0)),
            pl.BlockSpec((9, C, C), lambda n: (0, 0, 0)),
            pl.BlockSpec((9, C, C), lambda n: (0, 0, 0)),
            pl.BlockSpec((9, 1, S), lambda n: (0, 0, 0)),
            pl.BlockSpec((C, 1), lambda n: (0, 0)),
            pl.BlockSpec((C, 1), lambda n: (0, 0)),
            pl.BlockSpec((C, 1), lambda n: (0, 0)),
            pl.BlockSpec((C, 1), lambda n: (0, 0)),
        ],
        out_specs=pl.BlockSpec((1, C, S), lambda n: (n, 0, 0)),
        compiler_params=pltpu.CompilerParams(
            dimension_semantics=("parallel",),
            vmem_limit_bytes=32 * 1024 * 1024),
        cost_estimate=cost,
    )(x_ncs, w1_t, w2_t, masks, scale1, bias1, scale2, bias2)
    return out.reshape(N, C, H, W)


def _fold_bn(gamma, beta, mean, var):
    scale = gamma / jnp.sqrt(var + BN_EPS)
    return scale, beta - mean * scale


def basic_block_forward(x_nchw, params):
    """Matches BasicBlock.forward (eval-mode BN) with stride=1, downsample=None."""
    scale1, bias1 = _fold_bn(params["gamma1"], params["beta1"],
                             params["mean1"], params["var1"])
    scale2, bias2 = _fold_bn(params["gamma2"], params["beta2"],
                             params["mean2"], params["var2"])
    return basic_block_pallas(x_nchw, params["w1"], params["w2"],
                              scale1, bias1, scale2, bias2)


def init_basic_block_params(key, inplanes, planes):
    """Deterministic synthetic parameters (shapes match the PyTorch module)."""
    k1, k2, k3, k4, k5, k6 = jax.random.split(key, 6)
    return {
        # PyTorch conv weight is (out, in, 3, 3); stored here as HWIO (3,3,in,out).
        "w1": jax.random.normal(k1, (3, 3, inplanes, planes), jnp.float32) * 0.1,
        "gamma1": jax.random.normal(k2, (planes,), jnp.float32) * 0.1 + 1.0,
        "beta1": jax.random.normal(k3, (planes,), jnp.float32) * 0.1,
        "mean1": jnp.zeros((planes,), jnp.float32),
        "var1": jnp.ones((planes,), jnp.float32),
        "w2": jax.random.normal(k4, (3, 3, planes, planes), jnp.float32) * 0.1,
        "gamma2": jax.random.normal(k5, (planes,), jnp.float32) * 0.1 + 1.0,
        "beta2": jax.random.normal(k6, (planes,), jnp.float32) * 0.1,
        "mean2": jnp.zeros((planes,), jnp.float32),
        "var2": jnp.ones((planes,), jnp.float32),
    }


def basic_block_reference(x_nchw, params):
    """Pure-JAX reference for correctness checking."""
    x = jnp.transpose(x_nchw, (0, 2, 3, 1))

    def conv(v, w):
        return jax.lax.conv_general_dilated(
            v, w, window_strides=(1, 1), padding="SAME",
            dimension_numbers=("NHWC", "HWIO", "NHWC"))

    scale1, bias1 = _fold_bn(params["gamma1"], params["beta1"],
                             params["mean1"], params["var1"])
    scale2, bias2 = _fold_bn(params["gamma2"], params["beta2"],
                             params["mean2"], params["var2"])

    out = jnp.maximum(conv(x, params["w1"]) * scale1 + bias1, 0.0)
    out = conv(out, params["w2"]) * scale2 + bias2
    out = jnp.maximum(out + x, 0.0)
    return jnp.transpose(out, (0, 3, 1, 2))


if __name__ == "__main__":
    key = jax.random.PRNGKey(0)
    kx, kp = jax.random.split(key)

    N, C, H, W = 2, 4, 16, 16          # inplanes == planes == 4, stride 1
    x = jax.random.normal(kx, (N, C, H, W), jnp.float32)
    params = init_basic_block_params(kp, inplanes=C, planes=C)

    fwd = jax.jit(basic_block_forward)
    out = jax.block_until_ready(fwd(x, params))

    ref = jax.block_until_ready(basic_block_reference(x, params))
    assert out.shape == (N, C, H, W)
    # bf16 MXU operands -> looser tolerance than the f32-only version.
    assert jnp.allclose(out, ref, atol=5e-2, rtol=5e-2), "mismatch vs reference"

    print("KERNEL_OK")
</pallas_src>

<mosaic_0001>
module attributes {stable_mosaic.version = 11 : i64} {
  func.func @_basic_block_kernel(%arg0: i32, %arg1: memref<1x4x256xf32, #tpu.memory_space<vmem>>, %arg2: memref<9x4x4xbf16, #tpu.memory_space<vmem>>, %arg3: memref<9x4x4xbf16, #tpu.memory_space<vmem>>, %arg4: memref<9x1x256xf32, #tpu.memory_space<vmem>>, %arg5: memref<4x1xf32, #tpu.memory_space<vmem>>, %arg6: memref<4x1xf32, #tpu.memory_space<vmem>>, %arg7: memref<4x1xf32, #tpu.memory_space<vmem>>, %arg8: memref<4x1xf32, #tpu.memory_space<vmem>>, %arg9: memref<1x4x256xf32, #tpu.memory_space<vmem>>) attributes {dimension_semantics = [#tpu.dimension_semantics<parallel>], iteration_bounds = array<i64: 2>, scalar_prefetch = 0 : i64, scratch_operands = 0 : i64, tpu.core_type = #tpu.core_type<tc>, window_params = [{transform_indices = @transform_0, window_bounds = array<i64: 1, 4, 256>}, {pipeline_mode = #tpu.pipeline_mode<synchronous>, transform_indices = @transform_1, window_bounds = array<i64: 9, 4, 4>}, {pipeline_mode = #tpu.pipeline_mode<synchronous>, transform_indices = @transform_2, window_bounds = array<i64: 9, 4, 4>}, {pipeline_mode = #tpu.pipeline_mode<synchronous>, transform_indices = @transform_3, window_bounds = array<i64: 9, 1, 256>}, {pipeline_mode = #tpu.pipeline_mode<synchronous>, transform_indices = @transform_4, window_bounds = array<i64: 4, 1>}, {pipeline_mode = #tpu.pipeline_mode<synchronous>, transform_indices = @transform_5, window_bounds = array<i64: 4, 1>}, {pipeline_mode = #tpu.pipeline_mode<synchronous>, transform_indices = @transform_6, window_bounds = array<i64: 4, 1>}, {pipeline_mode = #tpu.pipeline_mode<synchronous>, transform_indices = @transform_7, window_bounds = array<i64: 4, 1>}, {transform_indices = @transform_8, window_bounds = array<i64: 1, 4, 256>}]} {
    %c0 = arith.constant 0 : index
    %c0_0 = arith.constant 0 : index
    %c0_1 = arith.constant 0 : index
    %0 = vector.load %arg1[%c0, %c0_0, %c0_1] : memref<1x4x256xf32, #tpu.memory_space<vmem>>, vector<1x4x256xf32>
    %1 = vector.shape_cast %0 : vector<1x4x256xf32> to vector<4x256xf32>
    %c17_i32 = arith.constant 17 : i32
    %2 = tpu.dynamic_rotate %1 by %c17_i32 dim 1 : vector<4x256xf32>, i32 -> vector<4x256xf32>
    %c0_2 = arith.constant 0 : index
    %c0_3 = arith.constant 0 : index
    %c0_4 = arith.constant 0 : index
    %3 = vector.load %arg4[%c0_2, %c0_3, %c0_4] : memref<9x1x256xf32, #tpu.memory_space<vmem>>, vector<1x1x256xf32>
    %4 = vector.shape_cast %3 : vector<1x1x256xf32> to vector<1x256xf32>
    %5 = vector.broadcast %4 : vector<1x256xf32> to vector<4x256xf32>
    %6 = arith.mulf %2, %5 : vector<4x256xf32>
    %c0_5 = arith.constant 0 : index
    %c0_6 = arith.constant 0 : index
    %c0_7 = arith.constant 0 : index
    %7 = vector.load %arg2[%c0_5, %c0_6, %c0_7] : memref<9x4x4xbf16, #tpu.memory_space<vmem>>, vector<1x4x4xbf16>
    %8 = vector.shape_cast %7 : vector<1x4x4xbf16> to vector<4x4xbf16>
    %9 = arith.truncf %6 : vector<4x256xf32> to vector<4x256xbf16>
    %cst = arith.constant dense<0.000000e+00> : vector<4x256xf32>
    %10 = tpu.matmul %8, %9, %cst {dimension_numbers = #tpu.dot_dimension_numbers<[1], [0], [0], [1], [0, 0, 1, 1], [], []>} : vector<4x4xbf16>, vector<4x256xbf16>, vector<4x256xf32> -> vector<4x256xf32>
    %c16_i32 = arith.constant 16 : i32
    %11 = tpu.dynamic_rotate %1 by %c16_i32 dim 1 : vector<4x256xf32>, i32 -> vector<4x256xf32>
    %c1 = arith.constant 1 : index
    %c0_8 = arith.constant 0 : index
    %c0_9 = arith.constant 0 : index
    %12 = vector.load %arg4[%c1, %c0_8, %c0_9] : memref<9x1x256xf32, #tpu.memory_space<vmem>>, vector<1x1x256xf32>
    %13 = vector.shape_cast %12 : vector<1x1x256xf32> to vector<1x256xf32>
    %14 = vector.broadcast %13 : vector<1x256xf32> to vector<4x256xf32>
    %15 = arith.mulf %11, %14 : vector<4x256xf32>
    %c1_10 = arith.constant 1 : index
    %c0_11 = arith.constant 0 : index
    %c0_12 = arith.constant 0 : index
    %16 = vector.load %arg2[%c1_10, %c0_11, %c0_12] : memref<9x4x4xbf16, #tpu.memory_space<vmem>>, vector<1x4x4xbf16>
    %17 = vector.shape_cast %16 : vector<1x4x4xbf16> to vector<4x4xbf16>
    %18 = arith.truncf %15 : vector<4x256xf32> to vector<4x256xbf16>
    %cst_13 = arith.constant dense<0.000000e+00> : vector<4x256xf32>
    %19 = tpu.matmul %17, %18, %cst_13 {dimension_numbers = #tpu.dot_dimension_numbers<[1], [0], [0], [1], [0, 0, 1, 1], [], []>} : vector<4x4xbf16>, vector<4x256xbf16>, vector<4x256xf32> -> vector<4x256xf32>
    %20 = arith.addf %10, %19 : vector<4x256xf32>
    %c15_i32 = arith.constant 15 : i32
    %21 = tpu.dynamic_rotate %1 by %c15_i32 dim 1 : vector<4x256xf32>, i32 -> vector<4x256xf32>
    %c2 = arith.constant 2 : index
    %c0_14 = arith.constant 0 : index
    %c0_15 = arith.constant 0 : index
    %22 = vector.load %arg4[%c2, %c0_14, %c0_15] : memref<9x1x256xf32, #tpu.memory_space<vmem>>, vector<1x1x256xf32>
    %23 = vector.shape_cast %22 : vector<1x1x256xf32> to vector<1x256xf32>
    %24 = vector.broadcast %23 : vector<1x256xf32> to vector<4x256xf32>
    %25 = arith.mulf %21, %24 : vector<4x256xf32>
    %c2_16 = arith.constant 2 : index
    %c0_17 = arith.constant 0 : index
    %c0_18 = arith.constant 0 : index
    %26 = vector.load %arg2[%c2_16, %c0_17, %c0_18] : memref<9x4x4xbf16, #tpu.memory_space<vmem>>, vector<1x4x4xbf16>
    %27 = vector.shape_cast %26 : vector<1x4x4xbf16> to vector<4x4xbf16>
    %28 = arith.truncf %25 : vector<4x256xf32> to vector<4x256xbf16>
    %cst_19 = arith.constant dense<0.000000e+00> : vector<4x256xf32>
    %29 = tpu.matmul %27, %28, %cst_19 {dimension_numbers = #tpu.dot_dimension_numbers<[1], [0], [0], [1], [0, 0, 1, 1], [], []>} : vector<4x4xbf16>, vector<4x256xbf16>, vector<4x256xf32> -> vector<4x256xf32>
    %30 = arith.addf %20, %29 : vector<4x256xf32>
    %c1_i32 = arith.constant 1 : i32
    %31 = tpu.dynamic_rotate %1 by %c1_i32 dim 1 : vector<4x256xf32>, i32 -> vector<4x256xf32>
    %c3 = arith.constant 3 : index
    %c0_20 = arith.constant 0 : index
    %c0_21 = arith.constant 0 : index
    %32 = vector.load %arg4[%c3, %c0_20, %c0_21] : memref<9x1x256xf32, #tpu.memory_space<vmem>>, vector<1x1x256xf32>
    %33 = vector.shape_cast %32 : vector<1x1x256xf32> to vector<1x256xf32>
    %34 = vector.broadcast %33 : vector<1x256xf32> to vector<4x256xf32>
    %35 = arith.mulf %31, %34 : vector<4x256xf32>
    %c3_22 = arith.constant 3 : index
    %c0_23 = arith.constant 0 : index
    %c0_24 = arith.constant 0 : index
    %36 = vector.load %arg2[%c3_22, %c0_23, %c0_24] : memref<9x4x4xbf16, #tpu.memory_space<vmem>>, vector<1x4x4xbf16>
    %37 = vector.shape_cast %36 : vector<1x4x4xbf16> to vector<4x4xbf16>
    %38 = arith.truncf %35 : vector<4x256xf32> to vector<4x256xbf16>
    %cst_25 = arith.constant dense<0.000000e+00> : vector<4x256xf32>
    %39 = tpu.matmul %37, %38, %cst_25 {dimension_numbers = #tpu.dot_dimension_numbers<[1], [0], [0], [1], [0, 0, 1, 1], [], []>} : vector<4x4xbf16>, vector<4x256xbf16>, vector<4x256xf32> -> vector<4x256xf32>
    %40 = arith.addf %30, %39 : vector<4x256xf32>
    %c4 = arith.constant 4 : index
    %c0_26 = arith.constant 0 : index
    %c0_27 = arith.constant 0 : index
    %41 = vector.load %arg2[%c4, %c0_26, %c0_27] : memref<9x4x4xbf16, #tpu.memory_space<vmem>>, vector<1x4x4xbf16>
    %42 = vector.shape_cast %41 : vector<1x4x4xbf16> to vector<4x4xbf16>
    %43 = arith.truncf %1 : vector<4x256xf32> to vector<4x256xbf16>
    %cst_28 = arith.constant dense<0.000000e+00> : vector<4x256xf32>
    %44 = tpu.matmul %42, %43, %cst_28 {dimension_numbers = #tpu.dot_dimension_numbers<[1], [0], [0], [1], [0, 0, 1, 1], [], []>} : vector<4x4xbf16>, vector<4x256xbf16>, vector<4x256xf32> -> vector<4x256xf32>
    %45 = arith.addf %40, %44 : vector<4x256xf32>
    %c255_i32 = arith.constant 255 : i32
    %46 = tpu.dynamic_rotate %1 by %c255_i32 dim 1 : vector<4x256xf32>, i32 -> vector<4x256xf32>
    %c5 = arith.constant 5 : index
    %c0_29 = arith.constant 0 : index
    %c0_30 = arith.constant 0 : index
    %47 = vector.load %arg4[%c5, %c0_29, %c0_30] : memref<9x1x256xf32, #tpu.memory_space<vmem>>, vector<1x1x256xf32>
    %48 = vector.shape_cast %47 : vector<1x1x256xf32> to vector<1x256xf32>
    %49 = vector.broadcast %48 : vector<1x256xf32> to vector<4x256xf32>
    %50 = arith.mulf %46, %49 : vector<4x256xf32>
    %c5_31 = arith.constant 5 : index
    %c0_32 = arith.constant 0 : index
    %c0_33 = arith.constant 0 : index
    %51 = vector.load %arg2[%c5_31, %c0_32, %c0_33] : memref<9x4x4xbf16, #tpu.memory_space<vmem>>, vector<1x4x4xbf16>
    %52 = vector.shape_cast %51 : vector<1x4x4xbf16> to vector<4x4xbf16>
    %53 = arith.truncf %50 : vector<4x256xf32> to vector<4x256xbf16>
    %cst_34 = arith.constant dense<0.000000e+00> : vector<4x256xf32>
    %54 = tpu.matmul %52, %53, %cst_34 {dimension_numbers = #tpu.dot_dimension_numbers<[1], [0], [0], [1], [0, 0, 1, 1], [], []>} : vector<4x4xbf16>, vector<4x256xbf16>, vector<4x256xf32> -> vector<4x256xf32>
    %55 = arith.addf %45, %54 : vector<4x256xf32>
    %c241_i32 = arith.constant 241 : i32
    %56 = tpu.dynamic_rotate %1 by %c241_i32 dim 1 : vector<4x256xf32>, i32 -> vector<4x256xf32>
    %c6 = arith.constant 6 : index
    %c0_35 = arith.constant 0 : index
    %c0_36 = arith.constant 0 : index
    %57 = vector.load %arg4[%c6, %c0_35, %c0_36] : memref<9x1x256xf32, #tpu.memory_space<vmem>>, vector<1x1x256xf32>
    %58 = vector.shape_cast %57 : vector<1x1x256xf32> to vector<1x256xf32>
    %59 = vector.broadcast %58 : vector<1x256xf32> to vector<4x256xf32>
    %60 = arith.mulf %56, %59 : vector<4x256xf32>
    %c6_37 = arith.constant 6 : index
    %c0_38 = arith.constant 0 : index
    %c0_39 = arith.constant 0 : index
    %61 = vector.load %arg2[%c6_37, %c0_38, %c0_39] : memref<9x4x4xbf16, #tpu.memory_space<vmem>>, vector<1x4x4xbf16>
    %62 = vector.shape_cast %61 : vector<1x4x4xbf16> to vector<4x4xbf16>
    %63 = arith.truncf %60 : vector<4x256xf32> to vector<4x256xbf16>
    %cst_40 = arith.constant dense<0.000000e+00> : vector<4x256xf32>
    %64 = tpu.matmul %62, %63, %cst_40 {dimension_numbers = #tpu.dot_dimension_numbers<[1], [0], [0], [1], [0, 0, 1, 1], [], []>} : vector<4x4xbf16>, vector<4x256xbf16>, vector<4x256xf32> -> vector<4x256xf32>
    %65 = arith.addf %55, %64 : vector<4x256xf32>
    %c240_i32 = arith.constant 240 : i32
    %66 = tpu.dynamic_rotate %1 by %c240_i32 dim 1 : vector<4x256xf32>, i32 -> vector<4x256xf32>
    %c7 = arith.constant 7 : index
    %c0_41 = arith.constant 0 : index
    %c0_42 = arith.constant 0 : index
    %67 = vector.load %arg4[%c7, %c0_41, %c0_42] : memref<9x1x256xf32, #tpu.memory_space<vmem>>, vector<1x1x256xf32>
    %68 = vector.shape_cast %67 : vector<1x1x256xf32> to vector<1x256xf32>
    %69 = vector.broadcast %68 : vector<1x256xf32> to vector<4x256xf32>
    %70 = arith.mulf %66, %69 : vector<4x256xf32>
    %c7_43 = arith.constant 7 : index
    %c0_44 = arith.constant 0 : index
    %c0_45 = arith.constant 0 : index
    %71 = vector.load %arg2[%c7_43, %c0_44, %c0_45] : memref<9x4x4xbf16, #tpu.memory_space<vmem>>, vector<1x4x4xbf16>
    %72 = vector.shape_cast %71 : vector<1x4x4xbf16> to vector<4x4xbf16>
    %73 = arith.truncf %70 : vector<4x256xf32> to vector<4x256xbf16>
    %cst_46 = arith.constant dense<0.000000e+00> : vector<4x256xf32>
    %74 = tpu.matmul %72, %73, %cst_46 {dimension_numbers = #tpu.dot_dimension_numbers<[1], [0], [0], [1], [0, 0, 1, 1], [], []>} : vector<4x4xbf16>, vector<4x256xbf16>, vector<4x256xf32> -> vector<4x256xf32>
    %75 = arith.addf %65, %74 : vector<4x256xf32>
    %c239_i32 = arith.constant 239 : i32
    %76 = tpu.dynamic_rotate %1 by %c239_i32 dim 1 : vector<4x256xf32>, i32 -> vector<4x256xf32>
    %c8 = arith.constant 8 : index
    %c0_47 = arith.constant 0 : index
    %c0_48 = arith.constant 0 : index
    %77 = vector.load %arg4[%c8, %c0_47, %c0_48] : memref<9x1x256xf32, #tpu.memory_space<vmem>>, vector<1x1x256xf32>
    %78 = vector.shape_cast %77 : vector<1x1x256xf32> to vector<1x256xf32>
    %79 = vector.broadcast %78 : vector<1x256xf32> to vector<4x256xf32>
    %80 = arith.mulf %76, %79 : vector<4x256xf32>
    %c8_49 = arith.constant 8 : index
    %c0_50 = arith.constant 0 : index
    %c0_51 = arith.constant 0 : index
    %81 = vector.load %arg2[%c8_49, %c0_50, %c0_51] : memref<9x4x4xbf16, #tpu.memory_space<vmem>>, vector<1x4x4xbf16>
    %82 = vector.shape_cast %81 : vector<1x4x4xbf16> to vector<4x4xbf16>
    %83 = arith.truncf %80 : vector<4x256xf32> to vector<4x256xbf16>
    %cst_52 = arith.constant dense<0.000000e+00> : vector<4x256xf32>
    %84 = tpu.matmul %82, %83, %cst_52 {dimension_numbers = #tpu.dot_dimension_numbers<[1], [0], [0], [1], [0, 0, 1, 1], [], []>} : vector<4x4xbf16>, vector<4x256xbf16>, vector<4x256xf32> -> vector<4x256xf32>
    %85 = arith.addf %75, %84 : vector<4x256xf32>
    %c0_53 = arith.constant 0 : index
    %c0_54 = arith.constant 0 : index
    %86 = vector.load %arg5[%c0_53, %c0_54] : memref<4x1xf32, #tpu.memory_space<vmem>>, vector<4x1xf32>
    %87 = vector.broadcast %86 : vector<4x1xf32> to vector<4x256xf32>
    %88 = arith.mulf %85, %87 : vector<4x256xf32>
    %c0_55 = arith.constant 0 : index
    %c0_56 = arith.constant 0 : index
    %89 = vector.load %arg6[%c0_55, %c0_56] : memref<4x1xf32, #tpu.memory_space<vmem>>, vector<4x1xf32>
    %90 = vector.broadcast %89 : vector<4x1xf32> to vector<4x256xf32>
    %91 = arith.addf %88, %90 : vector<4x256xf32>
    %cst_57 = arith.constant 0.000000e+00 : f32
    %92 = vector.broadcast %cst_57 : f32 to vector<4x256xf32>
    %93 = arith.maximumf %91, %92 : vector<4x256xf32>
    %c17_i32_58 = arith.constant 17 : i32
    %94 = tpu.dynamic_rotate %93 by %c17_i32_58 dim 1 : vector<4x256xf32>, i32 -> vector<4x256xf32>
    %c0_59 = arith.constant 0 : index
    %c0_60 = arith.constant 0 : index
    %c0_61 = arith.constant 0 : index
    %95 = vector.load %arg4[%c0_59, %c0_60, %c0_61] : memref<9x1x256xf32, #tpu.memory_space<vmem>>, vector<1x1x256xf32>
    %96 = vector.shape_cast %95 : vector<1x1x256xf32> to vector<1x256xf32>
    %97 = vector.broadcast %96 : vector<1x256xf32> to vector<4x256xf32>
    %98 = arith.mulf %94, %97 : vector<4x256xf32>
    %c0_62 = arith.constant 0 : index
    %c0_63 = arith.constant 0 : index
    %c0_64 = arith.constant 0 : index
    %99 = vector.load %arg3[%c0_62, %c0_63, %c0_64] : memref<9x4x4xbf16, #tpu.memory_space<vmem>>, vector<1x4x4xbf16>
    %100 = vector.shape_cast %99 : vector<1x4x4xbf16> to vector<4x4xbf16>
    %101 = arith.truncf %98 : vector<4x256xf32> to vector<4x256xbf16>
    %cst_65 = arith.constant dense<0.000000e+00> : vector<4x256xf32>
    %102 = tpu.matmul %100, %101, %cst_65 {dimension_numbers = #tpu.dot_dimension_numbers<[1], [0], [0], [1], [0, 0, 1, 1], [], []>} : vector<4x4xbf16>, vector<4x256xbf16>, vector<4x256xf32> -> vector<4x256xf32>
    %c16_i32_66 = arith.constant 16 : i32
    %103 = tpu.dynamic_rotate %93 by %c16_i32_66 dim 1 : vector<4x256xf32>, i32 -> vector<4x256xf32>
    %c1_67 = arith.constant 1 : index
    %c0_68 = arith.constant 0 : index
    %c0_69 = arith.constant 0 : index
    %104 = vector.load %arg4[%c1_67, %c0_68, %c0_69] : memref<9x1x256xf32, #tpu.memory_space<vmem>>, vector<1x1x256xf32>
    %105 = vector.shape_cast %104 : vector<1x1x256xf32> to vector<1x256xf32>
    %106 = vector.broadcast %105 : vector<1x256xf32> to vector<4x256xf32>
    %107 = arith.mulf %103, %106 : vector<4x256xf32>
    %c1_70 = arith.constant 1 : index
    %c0_71 = arith.constant 0 : index
    %c0_72 = arith.constant 0 : index
    %108 = vector.load %arg3[%c1_70, %c0_71, %c0_72] : memref<9x4x4xbf16, #tpu.memory_space<vmem>>, vector<1x4x4xbf16>
    %109 = vector.shape_cast %108 : vector<1x4x4xbf16> to vector<4x4xbf16>
    %110 = arith.truncf %107 : vector<4x256xf32> to vector<4x256xbf16>
    %cst_73 = arith.constant dense<0.000000e+00> : vector<4x256xf32>
    %111 = tpu.matmul %109, %110, %cst_73 {dimension_numbers = #tpu.dot_dimension_numbers<[1], [0], [0], [1], [0, 0, 1, 1], [], []>} : vector<4x4xbf16>, vector<4x256xbf16>, vector<4x256xf32> -> vector<4x256xf32>
    %112 = arith.addf %102, %111 : vector<4x256xf32>
    %c15_i32_74 = arith.constant 15 : i32
    %113 = tpu.dynamic_rotate %93 by %c15_i32_74 dim 1 : vector<4x256xf32>, i32 -> vector<4x256xf32>
    %c2_75 = arith.constant 2 : index
    %c0_76 = arith.constant 0 : index
    %c0_77 = arith.constant 0 : index
    %114 = vector.load %arg4[%c2_75, %c0_76, %c0_77] : memref<9x1x256xf32, #tpu.memory_space<vmem>>, vector<1x1x256xf32>
    %115 = vector.shape_cast %114 : vector<1x1x256xf32> to vector<1x256xf32>
    %116 = vector.broadcast %115 : vector<1x256xf32> to vector<4x256xf32>
    %117 = arith.mulf %113, %116 : vector<4x256xf32>
    %c2_78 = arith.constant 2 : index
    %c0_79 = arith.constant 0 : index
    %c0_80 = arith.constant 0 : index
    %118 = vector.load %arg3[%c2_78, %c0_79, %c0_80] : memref<9x4x4xbf16, #tpu.memory_space<vmem>>, vector<1x4x4xbf16>
    %119 = vector.shape_cast %118 : vector<1x4x4xbf16> to vector<4x4xbf16>
    %120 = arith.truncf %117 : vector<4x256xf32> to vector<4x256xbf16>
    %cst_81 = arith.constant dense<0.000000e+00> : vector<4x256xf32>
    %121 = tpu.matmul %119, %120, %cst_81 {dimension_numbers = #tpu.dot_dimension_numbers<[1], [0], [0], [1], [0, 0, 1, 1], [], []>} : vector<4x4xbf16>, vector<4x256xbf16>, vector<4x256xf32> -> vector<4x256xf32>
    %122 = arith.addf %112, %121 : vector<4x256xf32>
    %c1_i32_82 = arith.constant 1 : i32
    %123 = tpu.dynamic_rotate %93 by %c1_i32_82 dim 1 : vector<4x256xf32>, i32 -> vector<4x256xf32>
    %c3_83 = arith.constant 3 : index
    %c0_84 = arith.constant 0 : index
    %c0_85 = arith.constant 0 : index
    %124 = vector.load %arg4[%c3_83, %c0_84, %c0_85] : memref<9x1x256xf32, #tpu.memory_space<vmem>>, vector<1x1x256xf32>
    %125 = vector.shape_cast %124 : vector<1x1x256xf32> to vector<1x256xf32>
    %126 = vector.broadcast %125 : vector<1x256xf32> to vector<4x256xf32>
    %127 = arith.mulf %123, %126 : vector<4x256xf32>
    %c3_86 = arith.constant 3 : index
    %c0_87 = arith.constant 0 : index
    %c0_88 = arith.constant 0 : index
    %128 = vector.load %arg3[%c3_86, %c0_87, %c0_88] : memref<9x4x4xbf16, #tpu.memory_space<vmem>>, vector<1x4x4xbf16>
    %129 = vector.shape_cast %128 : vector<1x4x4xbf16> to vector<4x4xbf16>
    %130 = arith.truncf %127 : vector<4x256xf32> to vector<4x256xbf16>
    %cst_89 = arith.constant dense<0.000000e+00> : vector<4x256xf32>
    %131 = tpu.matmul %129, %130, %cst_89 {dimension_numbers = #tpu.dot_dimension_numbers<[1], [0], [0], [1], [0, 0, 1, 1], [], []>} : vector<4x4xbf16>, vector<4x256xbf16>, vector<4x256xf32> -> vector<4x256xf32>
    %132 = arith.addf %122, %131 : vector<4x256xf32>
    %c4_90 = arith.constant 4 : index
    %c0_91 = arith.constant 0 : index
    %c0_92 = arith.constant 0 : index
    %133 = vector.load %arg3[%c4_90, %c0_91, %c0_92] : memref<9x4x4xbf16, #tpu.memory_space<vmem>>, vector<1x4x4xbf16>
    %134 = vector.shape_cast %133 : vector<1x4x4xbf16> to vector<4x4xbf16>
    %135 = arith.truncf %93 : vector<4x256xf32> to vector<4x256xbf16>
    %cst_93 = arith.constant dense<0.000000e+00> : vector<4x256xf32>
    %136 = tpu.matmul %134, %135, %cst_93 {dimension_numbers = #tpu.dot_dimension_numbers<[1], [0], [0], [1], [0, 0, 1, 1], [], []>} : vector<4x4xbf16>, vector<4x256xbf16>, vector<4x256xf32> -> vector<4x256xf32>
    %137 = arith.addf %132, %136 : vector<4x256xf32>
    %c255_i32_94 = arith.constant 255 : i32
    %138 = tpu.dynamic_rotate %93 by %c255_i32_94 dim 1 : vector<4x256xf32>, i32 -> vector<4x256xf32>
    %c5_95 = arith.constant 5 : index
    %c0_96 = arith.constant 0 : index
    %c0_97 = arith.constant 0 : index
    %139 = vector.load %arg4[%c5_95, %c0_96, %c0_97] : memref<9x1x256xf32, #tpu.memory_space<vmem>>, vector<1x1x256xf32>
    %140 = vector.shape_cast %139 : vector<1x1x256xf32> to vector<1x256xf32>
    %141 = vector.broadcast %140 : vector<1x256xf32> to vector<4x256xf32>
    %142 = arith.mulf %138, %141 : vector<4x256xf32>
    %c5_98 = arith.constant 5 : index
    %c0_99 = arith.constant 0 : index
    %c0_100 = arith.constant 0 : index
    %143 = vector.load %arg3[%c5_98, %c0_99, %c0_100] : memref<9x4x4xbf16, #tpu.memory_space<vmem>>, vector<1x4x4xbf16>
    %144 = vector.shape_cast %143 : vector<1x4x4xbf16> to vector<4x4xbf16>
    %145 = arith.truncf %142 : vector<4x256xf32> to vector<4x256xbf16>
    %cst_101 = arith.constant dense<0.000000e+00> : vector<4x256xf32>
    %146 = tpu.matmul %144, %145, %cst_101 {dimension_numbers = #tpu.dot_dimension_numbers<[1], [0], [0], [1], [0, 0, 1, 1], [], []>} : vector<4x4xbf16>, vector<4x256xbf16>, vector<4x256xf32> -> vector<4x256xf32>
    %147 = arith.addf %137, %146 : vector<4x256xf32>
    %c241_i32_102 = arith.constant 241 : i32
    %148 = tpu.dynamic_rotate %93 by %c241_i32_102 dim 1 : vector<4x256xf32>, i32 -> vector<4x256xf32>
    %c6_103 = arith.constant 6 : index
    %c0_104 = arith.constant 0 : index
    %c0_105 = arith.constant 0 : index
    %149 = vector.load %arg4[%c6_103, %c0_104, %c0_105] : memref<9x1x256xf32, #tpu.memory_space<vmem>>, vector<1x1x256xf32>
    %150 = vector.shape_cast %149 : vector<1x1x256xf32> to vector<1x256xf32>
    %151 = vector.broadcast %150 : vector<1x256xf32> to vector<4x256xf32>
    %152 = arith.mulf %148, %151 : vector<4x256xf32>
    %c6_106 = arith.constant 6 : index
    %c0_107 = arith.constant 0 : index
    %c0_108 = arith.constant 0 : index
    %153 = vector.load %arg3[%c6_106, %c0_107, %c0_108] : memref<9x4x4xbf16, #tpu.memory_space<vmem>>, vector<1x4x4xbf16>
    %154 = vector.shape_cast %153 : vector<1x4x4xbf16> to vector<4x4xbf16>
    %155 = arith.truncf %152 : vector<4x256xf32> to vector<4x256xbf16>
    %cst_109 = arith.constant dense<0.000000e+00> : vector<4x256xf32>
    %156 = tpu.matmul %154, %155, %cst_109 {dimension_numbers = #tpu.dot_dimension_numbers<[1], [0], [0], [1], [0, 0, 1, 1], [], []>} : vector<4x4xbf16>, vector<4x256xbf16>, vector<4x256xf32> -> vector<4x256xf32>
    %157 = arith.addf %147, %156 : vector<4x256xf32>
    %c240_i32_110 = arith.constant 240 : i32
    %158 = tpu.dynamic_rotate %93 by %c240_i32_110 dim 1 : vector<4x256xf32>, i32 -> vector<4x256xf32>
    %c7_111 = arith.constant 7 : index
    %c0_112 = arith.constant 0 : index
    %c0_113 = arith.constant 0 : index
    %159 = vector.load %arg4[%c7_111, %c0_112, %c0_113] : memref<9x1x256xf32, #tpu.memory_space<vmem>>, vector<1x1x256xf32>
    %160 = vector.shape_cast %159 : vector<1x1x256xf32> to vector<1x256xf32>
    %161 = vector.broadcast %160 : vector<1x256xf32> to vector<4x256xf32>
    %162 = arith.mulf %158, %161 : vector<4x256xf32>
    %c7_114 = arith.constant 7 : index
    %c0_115 = arith.constant 0 : index
    %c0_116 = arith.constant 0 : index
    %163 = vector.load %arg3[%c7_114, %c0_115, %c0_116] : memref<9x4x4xbf16, #tpu.memory_space<vmem>>, vector<1x4x4xbf16>
    %164 = vector.shape_cast %163 : vector<1x4x4xbf16> to vector<4x4xbf16>
    %165 = arith.truncf %162 : vector<4x256xf32> to vector<4x256xbf16>
    %cst_117 = arith.constant dense<0.000000e+00> : vector<4x256xf32>
    %166 = tpu.matmul %164, %165, %cst_117 {dimension_numbers = #tpu.dot_dimension_numbers<[1], [0], [0], [1], [0, 0, 1, 1], [], []>} : vector<4x4xbf16>, vector<4x256xbf16>, vector<4x256xf32> -> vector<4x256xf32>
    %167 = arith.addf %157, %166 : vector<4x256xf32>
    %c239_i32_118 = arith.constant 239 : i32
    %168 = tpu.dynamic_rotate %93 by %c239_i32_118 dim 1 : vector<4x256xf32>, i32 -> vector<4x256xf32>
    %c8_119 = arith.constant 8 : index
    %c0_120 = arith.constant 0 : index
    %c0_121 = arith.constant 0 : index
    %169 = vector.load %arg4[%c8_119, %c0_120, %c0_121] : memref<9x1x256xf32, #tpu.memory_space<vmem>>, vector<1x1x256xf32>
    %170 = vector.shape_cast %169 : vector<1x1x256xf32> to vector<1x256xf32>
    %171 = vector.broadcast %170 : vector<1x256xf32> to vector<4x256xf32>
    %172 = arith.mulf %168, %171 : vector<4x256xf32>
    %c8_122 = arith.constant 8 : index
    %c0_123 = arith.constant 0 : index
    %c0_124 = arith.constant 0 : index
    %173 = vector.load %arg3[%c8_122, %c0_123, %c0_124] : memref<9x4x4xbf16, #tpu.memory_space<vmem>>, vector<1x4x4xbf16>
    %174 = vector.shape_cast %173 : vector<1x4x4xbf16> to vector<4x4xbf16>
    %175 = arith.truncf %172 : vector<4x256xf32> to vector<4x256xbf16>
    %cst_125 = arith.constant dense<0.000000e+00> : vector<4x256xf32>
    %176 = tpu.matmul %174, %175, %cst_125 {dimension_numbers = #tpu.dot_dimension_numbers<[1], [0], [0], [1], [0, 0, 1, 1], [], []>} : vector<4x4xbf16>, vector<4x256xbf16>, vector<4x256xf32> -> vector<4x256xf32>
    %177 = arith.addf %167, %176 : vector<4x256xf32>
    %c0_126 = arith.constant 0 : index
    %c0_127 = arith.constant 0 : index
    %178 = vector.load %arg7[%c0_126, %c0_127] : memref<4x1xf32, #tpu.memory_space<vmem>>, vector<4x1xf32>
    %179 = vector.broadcast %178 : vector<4x1xf32> to vector<4x256xf32>
    %180 = arith.mulf %177, %179 : vector<4x256xf32>
    %c0_128 = arith.constant 0 : index
    %c0_129 = arith.constant 0 : index
    %181 = vector.load %arg8[%c0_128, %c0_129] : memref<4x1xf32, #tpu.memory_space<vmem>>, vector<4x1xf32>
    %182 = vector.broadcast %181 : vector<4x1xf32> to vector<4x256xf32>
    %183 = arith.addf %180, %182 : vector<4x256xf32>
    %c0_130 = arith.constant 0 : index
    %c0_131 = arith.constant 0 : index
    %c0_132 = arith.constant 0 : index
    %184 = vector.load %arg1[%c0_130, %c0_131, %c0_132] : memref<1x4x256xf32, #tpu.memory_space<vmem>>, vector<1x4x256xf32>
    %185 = vector.shape_cast %184 : vector<1x4x256xf32> to vector<4x256xf32>
    %186 = arith.addf %183, %185 : vector<4x256xf32>
    %cst_133 = arith.constant 0.000000e+00 : f32
    %187 = vector.broadcast %cst_133 : f32 to vector<4x256xf32>
    %188 = arith.maximumf %186, %187 : vector<4x256xf32>
    %c0_134 = arith.constant 0 : index
    %c0_135 = arith.constant 0 : index
    %c0_136 = arith.constant 0 : index
    %189 = vector.load %arg9[%c0_134, %c0_135, %c0_136] : memref<1x4x256xf32, #tpu.memory_space<vmem>>, vector<1x4x256xf32>
    %190 = vector.shape_cast %189 : vector<1x4x256xf32> to vector<4x256xf32>
    %191 = vector.shape_cast %188 : vector<4x256xf32> to vector<1x4x256xf32>
    tpu.vector_store %arg9[%c0_134, %c0_135, %c0_136], %191 {strides = array<i32>} : memref<1x4x256xf32, #tpu.memory_space<vmem>>, vector<1x4x256xf32>,
    return
  }
  func.func @transform_0(%arg0: i32) -> (i32, i32, i32) {
    %c0_i32 = arith.constant 0 : i32
    %c0_i32_0 = arith.constant 0 : i32
    %c0_i32_1 = arith.constant 0 : i32
    return %arg0, %c0_i32, %c0_i32_0 : i32, i32, i32
  }
  func.func @transform_1(%arg0: i32) -> (i32, i32, i32) {
    %c0_i32 = arith.constant 0 : i32
    %c0_i32_0 = arith.constant 0 : i32
    %c0_i32_1 = arith.constant 0 : i32
    %c0_i32_2 = arith.constant 0 : i32
    return %c0_i32, %c0_i32_0, %c0_i32_1 : i32, i32, i32
  }
  func.func @transform_2(%arg0: i32) -> (i32, i32, i32) {
    %c0_i32 = arith.constant 0 : i32
    %c0_i32_0 = arith.constant 0 : i32
    %c0_i32_1 = arith.constant 0 : i32
    %c0_i32_2 = arith.constant 0 : i32
    return %c0_i32, %c0_i32_0, %c0_i32_1 : i32, i32, i32
  }
  func.func @transform_3(%arg0: i32) -> (i32, i32, i32) {
    %c0_i32 = arith.constant 0 : i32
    %c0_i32_0 = arith.constant 0 : i32
    %c0_i32_1 = arith.constant 0 : i32
    %c0_i32_2 = arith.constant 0 : i32
    return %c0_i32, %c0_i32_0, %c0_i32_1 : i32, i32, i32
  }
  func.func @transform_4(%arg0: i32) -> (i32, i32) {
    %c0_i32 = arith.constant 0 : i32
    %c0_i32_0 = arith.constant 0 : i32
    %c0_i32_1 = arith.constant 0 : i32
    return %c0_i32, %c0_i32_0 : i32, i32
  }
  func.func @transform_5(%arg0: i32) -> (i32, i32) {
    %c0_i32 = arith.constant 0 : i32
    %c0_i32_0 = arith.constant 0 : i32
    %c0_i32_1 = arith.constant 0 : i32
    return %c0_i32, %c0_i32_0 : i32, i32
  }
  func.func @transform_6(%arg0: i32) -> (i32, i32) {
    %c0_i32 = arith.constant 0 : i32
    %c0_i32_0 = arith.constant 0 : i32
    %c0_i32_1 = arith.constant 0 : i32
    return %c0_i32, %c0_i32_0 : i32, i32
  }
  func.func @transform_7(%arg0: i32) -> (i32, i32) {
    %c0_i32 = arith.constant 0 : i32
    %c0_i32_0 = arith.constant 0 : i32
    %c0_i32_1 = arith.constant 0 : i32
    return %c0_i32, %c0_i32_0 : i32, i32
  }
  func.func @transform_8(%arg0: i32) -> (i32, i32, i32) {
    %c0_i32 = arith.constant 0 : i32
    %c0_i32_0 = arith.constant 0 : i32
    %c0_i32_1 = arith.constant 0 : i32
    return %arg0, %c0_i32, %c0_i32_0 : i32, i32, i32
  }
}

</mosaic_0001>

<llo_original>
// kernel: basic_block_forward.1
$region0: #{basic_block_forward.1}
  #allocation0 [shape = 'u32[]', space=smem, size = 0x4, offset = 0x4, fixed_abs, tag = 'smem constant byte address 0x4 - core index']
  #allocation1 [shape = 'u32[144,128]{1,0:T(1,128)}', space=vmem, size = 0x12000, scoped, tag = 'internal scratch']
  %s0 = inlined_call_operand.vmem [shape: f32[2,4,256], index: 0, kind: input, shape index: {}]
  %s1 = inlined_call_operand.vmem [shape: bf16[9,4,4], index: 1, kind: input, shape index: {}]
  %s2 = inlined_call_operand.vmem [shape: bf16[9,4,4], index: 2, kind: input, shape index: {}]
  %s3 = inlined_call_operand.vmem [shape: f32[9,1,256], index: 3, kind: input, shape index: {}]
  %s4 = inlined_call_operand.vmem [shape: f32[4,1], index: 4, kind: input, shape index: {}]
  %s5 = inlined_call_operand.vmem [shape: f32[4,1], index: 5, kind: input, shape index: {}]
  %s6 = inlined_call_operand.vmem [shape: f32[4,1], index: 6, kind: input, shape index: {}]
  %s7 = inlined_call_operand.vmem [shape: f32[4,1], index: 7, kind: input, shape index: {}]
  %s8 = inlined_call_operand.vmem [shape: f32[2,4,256], index: 8, kind: output, shape index: {}]
  %s9 = sld [smem:[#allocation0]]
  $region65: #{basic_block_forward.1} parent=0
    _
  %s11 = ssub.s32 1, %s9
  %s12 = scalar_select 0, %s11, %s9
  loop: start=0, step=1, limit=4
  $region2: #{basic_block_forward.1} parent=0 // loop_pre_header
    _
  $region3: #{basic_block_forward.1} parent=0 // loop_header
    %s14 = sphi 0, %s18
    %p15 = scmp.ge.s32.totalorder %s14, 4
    %s24 = sphi 0, %s26
    %s27 = sphi 0, %s24
    %s28 = sphi 0, %s27
    %s44 = sphi 0, %s28
    %s48 = sphi 0, %s48
    %s50 = sphi 0, %s48
    %s51 = sphi 0, %s50
    %s65 = sphi 0, %s51
    %s69 = sphi 0, %s69
    %s71 = sphi 0, %s69
    %s72 = sphi 0, %s71
    %s86 = sphi 0, %s72
    %s90 = sphi 0, %s90
    %s92 = sphi 0, %s90
    %s93 = sphi 0, %s92
    %s107 = sphi 0, %s93
    %s111 = sphi 0, %s111
    %s113 = sphi 0, %s111
    %s114 = sphi 0, %s113
    %s128 = sphi 0, %s114
    %s132 = sphi 0, %s132
    %s134 = sphi 0, %s132
    %s135 = sphi 0, %s134
    %s149 = sphi 0, %s135
    %s153 = sphi 0, %s153
    %s155 = sphi 0, %s153
    %s156 = sphi 0, %s155
    %s170 = sphi 0, %s156
    %s174 = sphi 0, %s174
    %s176 = sphi 0, %s174
    %s177 = sphi 0, %s176
    %s191 = sphi 0, %s177
    %s197 = sphi 0, %s199
    %s200 = sphi 0, %s197
    %s201 = sphi 0, %s200
    %s217 = sphi 0, %s201
  $region4: #{basic_block_forward.1} parent=0 // loop_header_branch
    %17 = sbr.rel (%p15) target = $region8
  $region5: #{basic_block_forward.1} parent=0 // loop_body
    %s19 = ssub.s32 %s14, 1
    %s20 = ssub.s32 %s14, 2
    %s21 = sadd.s32 %s14, 1
    %s22 = ssub.s32 %s14, %s21
    %p23 = scmp.eq.s32.totalorder %s22, 0
    %s25 = sadd.s32 %s24, 1
    %s26 = scalar_select %p23, %s24, %s25
    %p29 = pneg %p23
    %p30 = scmp.eq.s32.totalorder %s14, 1
    %p31 = por %p29, %p30
    %p32 = scmp.ne.s32.totalorder %s24, %s27
    %p33 = scmp.eq.s32.totalorder %s14, 0
    %p34 = por %p32, %p33
    %p35 = scmp.ne.s32.totalorder %s24, %s27
    %p36 = scmp.eq.s32.totalorder %s19, 1
    %p37 = por %p35, %p36
    %p38 = scmp.ne.s32.totalorder %s27, %s28
    %p39 = scmp.eq.s32.totalorder %s19, 0
    %p40 = por %p38, %p39
    %p41 = scmp.ne.s32.totalorder %s27, %s28
    %p42 = scmp.eq.s32.totalorder %s20, 1
    %p43 = por %p41, %p42
    %p45 = scmp.ne.s32.totalorder %s28, %s44
    %p46 = scmp.eq.s32.totalorder %s20, 0
    %p47 = por %p45, %p46
    %s49 = sadd.s32 %s48, 1
    %p52 = scmp.eq.s32.totalorder %s14, 1
    %p53 = scmp.ne.s32.totalorder %s48, %s50
    %p54 = scmp.eq.s32.totalorder %s14, 0
    %p55 = por %p53, %p54
    %p56 = scmp.ne.s32.totalorder %s48, %s50
    %p57 = scmp.eq.s32.totalorder %s19, 1
    %p58 = por %p56, %p57
    %p59 = scmp.ne.s32.totalorder %s50, %s51
    %p60 = scmp.eq.s32.totalorder %s19, 0
    %p61 = por %p59, %p60
    %p62 = scmp.ne.s32.totalorder %s50, %s51
    %p63 = scmp.eq.s32.totalorder %s20, 1
    %p64 = por %p62, %p63
    %p66 = scmp.ne.s32.totalorder %s51, %s65
    %p67 = scmp.eq.s32.totalorder %s20, 0
    %p68 = por %p66, %p67
    %s70 = sadd.s32 %s69, 1
    %p73 = scmp.eq.s32.totalorder %s14, 1
    %p74 = scmp.ne.s32.totalorder %s69, %s71
    %p75 = scmp.eq.s32.totalorder %s14, 0
    %p76 = por %p74, %p75
    %p77 = scmp.ne.s32.totalorder %s69, %s71
    %p78 = scmp.eq.s32.totalorder %s19, 1
    %p79 = por %p77, %p78
    %p80 = scmp.ne.s32.totalorder %s71, %s72
    %p81 = scmp.eq.s32.totalorder %s19, 0
    %p82 = por %p80, %p81
    %p83 = scmp.ne.s32.totalorder %s71, %s72
    %p84 = scmp.eq.s32.totalorder %s20, 1
    %p85 = por %p83, %p84
    %p87 = scmp.ne.s32.totalorder %s72, %s86
    %p88 = scmp.eq.s32.totalorder %s20, 0
    %p89 = por %p87, %p88
    %s91 = sadd.s32 %s90, 1
    %p94 = scmp.eq.s32.totalorder %s14, 1
    %p95 = scmp.ne.s32.totalorder %s90, %s92
    %p96 = scmp.eq.s32.totalorder %s14, 0
    %p97 = por %p95, %p96
    %p98 = scmp.ne.s32.totalorder %s90, %s92
    %p99 = scmp.eq.s32.totalorder %s19, 1
    %p100 = por %p98, %p99
    %p101 = scmp.ne.s32.totalorder %s92, %s93
    %p102 = scmp.eq.s32.totalorder %s19, 0
    %p103 = por %p101, %p102
    %p104 = scmp.ne.s32.totalorder %s92, %s93
    %p105 = scmp.eq.s32.totalorder %s20, 1
    %p106 = por %p104, %p105
    %p108 = scmp.ne.s32.totalorder %s93, %s107
    %p109 = scmp.eq.s32.totalorder %s20, 0
    %p110 = por %p108, %p109
    %s112 = sadd.s32 %s111, 1
    %p115 = scmp.eq.s32.totalorder %s14, 1
    %p116 = scmp.ne.s32.totalorder %s111, %s113
    %p117 = scmp.eq.s32.totalorder %s14, 0
    %p118 = por %p116, %p117
    %p119 = scmp.ne.s32.totalorder %s111, %s113
    %p120 = scmp.eq.s32.totalorder %s19, 1
    %p121 = por %p119, %p120
    %p122 = scmp.ne.s32.totalorder %s113, %s114
    %p123 = scmp.eq.s32.totalorder %s19, 0
    %p124 = por %p122, %p123
    %p125 = scmp.ne.s32.totalorder %s113, %s114
    %p126 = scmp.eq.s32.totalorder %s20, 1
    %p127 = por %p125, %p126
    %p129 = scmp.ne.s32.totalorder %s114, %s128
    %p130 = scmp.eq.s32.totalorder %s20, 0
    %p131 = por %p129, %p130
    %s133 = sadd.s32 %s132, 1
    %p136 = scmp.eq.s32.totalorder %s14, 1
    %p137 = scmp.ne.s32.totalorder %s132, %s134
    %p138 = scmp.eq.s32.totalorder %s14, 0
    %p139 = por %p137, %p138
    %p140 = scmp.ne.s32.totalorder %s132, %s134
    %p141 = scmp.eq.s32.totalorder %s19, 1
    %p142 = por %p140, %p141
    %p143 = scmp.ne.s32.totalorder %s134, %s135
    %p144 = scmp.eq.s32.totalorder %s19, 0
    %p145 = por %p143, %p144
    %p146 = scmp.ne.s32.totalorder %s134, %s135
    %p147 = scmp.eq.s32.totalorder %s20, 1
    %p148 = por %p146, %p147
    %p150 = scmp.ne.s32.totalorder %s135, %s149
    %p151 = scmp.eq.s32.totalorder %s20, 0
    %p152 = por %p150, %p151
    %s154 = sadd.s32 %s153, 1
    %p157 = scmp.eq.s32.totalorder %s14, 1
    %p158 = scmp.ne.s32.totalorder %s153, %s155
    %p159 = scmp.eq.s32.totalorder %s14, 0
    %p160 = por %p158, %p159
    %p161 = scmp.ne.s32.totalorder %s153, %s155
    %p162 = scmp.eq.s32.totalorder %s19, 1
    %p163 = por %p161, %p162
    %p164 = scmp.ne.s32.totalorder %s155, %s156
    %p165 = scmp.eq.s32.totalorder %s19, 0
    %p166 = por %p164, %p165
    %p167 = scmp.ne.s32.totalorder %s155, %s156
    %p168 = scmp.eq.s32.totalorder %s20, 1
    %p169 = por %p167, %p168
    %p171 = scmp.ne.s32.totalorder %s156, %s170
    %p172 = scmp.eq.s32.totalorder %s20, 0
    %p173 = por %p171, %p172
    %s175 = sadd.s32 %s174, 1
    %p178 = scmp.eq.s32.totalorder %s14, 1
    %p179 = scmp.ne.s32.totalorder %s174, %s176
    %p180 = scmp.eq.s32.totalorder %s14, 0
    %p181 = por %p179, %p180
    %p182 = scmp.ne.s32.totalorder %s174, %s176
    %p183 = scmp.eq.s32.totalorder %s19, 1
    %p184 = por %p182, %p183
    %p185 = scmp.ne.s32.totalorder %s176, %s177
    %p186 = scmp.eq.s32.totalorder %s19, 0
    %p187 = por %p185, %p186
    %p188 = scmp.ne.s32.totalorder %s176, %s177
    %p189 = scmp.eq.s32.totalorder %s20, 1
    %p190 = por %p188, %p189
    %p192 = scmp.ne.s32.totalorder %s177, %s191
    %p193 = scmp.eq.s32.totalorder %s20, 0
    %p194 = por %p192, %p193
    %s195 = ssub.s32 %s14, %s21
    %p196 = scmp.eq.s32.totalorder %s195, 0
    %s198 = sadd.s32 %s197, 1
    %s199 = scalar_select %p196, %s197, %s198
    %p202 = pneg %p196
    %p203 = scmp.eq.s32.totalorder %s14, 1
    %p204 = por %p202, %p203
    %p205 = scmp.ne.s32.totalorder %s197, %s200
    %p206 = scmp.eq.s32.totalorder %s14, 0
    %p207 = por %p205, %p206
    %p208 = scmp.ne.s32.totalorder %s197, %s200
    %p209 = scmp.eq.s32.totalorder %s19, 1
    %p210 = por %p208, %p209
    %p211 = scmp.ne.s32.totalorder %s200, %s201
    %p212 = scmp.eq.s32.totalorder %s19, 0
    %p213 = por %p211, %p212
    %p214 = scmp.ne.s32.totalorder %s200, %s201
    %p215 = scmp.eq.s32.totalorder %s20, 1
    %p216 = por %p214, %p215
    %p218 = scmp.ne.s32.totalorder %s201, %s217
    %p219 = scmp.eq.s32.totalorder %s20, 0
    %p220 = por %p218, %p219
    %p221 = scmp.le.s32.totalorder 1, %s14
    %p222 = scmp.lt.s32.totalorder %s14, 3
    %p223 = pnand %p221, %p222
    %p224 = pneg %p223
    // Predicated region
    $region9: #{basic_block_forward.1} parent=5 // pred_check
      _
    $region10: #{basic_block_forward.1} parent=5 // pred_check_branch
      %226 = sbr.rel (%p223) target = $region12
    $region11: #{basic_block_forward.1} parent=5 // pred_region
      %s227 = ssub.s32 %s14, 1
      // Predicated region
      $region13: #{basic_block_forward.1} parent=11 // pred_check
        %p228 = pneg %p61
      $region14: #{basic_block_forward.1} parent=11 // pred_check_branch
        %230 = sbr.rel (%p228) target = $region16
      $region15: #{basic_block_forward.1} parent=11 // pred_region
        _
      $region16: #{basic_block_forward.1} parent=11 // pred_fallthru
        _
      // Predicated region
      $region17: #{basic_block_forward.1} parent=11 // pred_check
        %p231 = pneg %p82
      $region18: #{basic_block_forward.1} parent=11 // pred_check_branch
        %233 = sbr.rel (%p231) target = $region20
      $region19: #{basic_block_forward.1} parent=11 // pred_region
        _
      $region20: #{basic_block_forward.1} parent=11 // pred_fallthru
        _
      // Predicated region
      $region21: #{basic_block_forward.1} parent=11 // pred_check
        %p234 = pneg %p103
      $region22: #{basic_block_forward.1} parent=11 // pred_check_branch
        %236 = sbr.rel (%p234) target = $region24
      $region23: #{basic_block_forward.1} parent=11 // pred_region
        _
      $region24: #{basic_block_forward.1} parent=11 // pred_fallthru
        _
      // Predicated region
      $region25: #{basic_block_forward.1} parent=11 // pred_check
        %p237 = pneg %p124
      $region26: #{basic_block_forward.1} parent=11 // pred_check_branch
        %239 = sbr.rel (%p237) target = $region28
      $region27: #{basic_block_forward.1} parent=11 // pred_region
        _
      $region28: #{basic_block_forward.1} parent=11 // pred_fallthru
        _
      // Predicated region
      $region29: #{basic_block_forward.1} parent=11 // pred_check
        %p240 = pneg %p145
      $region30: #{basic_block_forward.1} parent=11 // pred_check_branch
        %242 = sbr.rel (%p240) target = $region32
      $region31: #{basic_block_forward.1} parent=11 // pred_region
        _
      $region32: #{basic_block_forward.1} parent=11 // pred_fallthru
        _
      // Predicated region
      $region33: #{basic_block_forward.1} parent=11 // pred_check
        %p243 = pneg %p166
      $region34: #{basic_block_forward.1} parent=11 // pred_check_branch
        %245 = sbr.rel (%p243) target = $region36
      $region35: #{basic_block_forward.1} parent=11 // pred_region
        _
      $region36: #{basic_block_forward.1} parent=11 // pred_fallthru
        _
      // Predicated region
      $region37: #{basic_block_forward.1} parent=11 // pred_check
        %p246 = pneg %p187
      $region38: #{basic_block_forward.1} parent=11 // pred_check_branch
        %248 = sbr.rel (%p246) target = $region40
      $region39: #{basic_block_forward.1} parent=11 // pred_region
        _
      $region40: #{basic_block_forward.1} parent=11 // pred_fallthru
        _
    $region12: #{basic_block_forward.1} parent=5 // pred_fallthru
      _
    %p249 = scmp.lt.s32.totalorder %s14, 2
    // Predicated region
    $region41: #{basic_block_forward.1} parent=5 // pred_check
      %p250 = pneg %p249
    $region42: #{basic_block_forward.1} parent=5 // pred_check_branch
      %252 = sbr.rel (%p250) target = $region44
    $region43: #{basic_block_forward.1} parent=5 // pred_region
      // Predicated region
      $region45: #{basic_block_forward.1} parent=43 // pred_check
        %p253 = pneg %p34
      $region46: #{basic_block_forward.1} parent=43 // pred_check_branch
        %255 = sbr.rel (%p253) target = $region48
      $region47: #{basic_block_forward.1} parent=43 // pred_region
        %p256 = scmp.lt.s32.totalorder %s14, 1
        %s257 = scalar_select %p256, %s14, 1
        %s258 = smul.addr %s257, 2
        %s259 = smul.addr %s258, 4
        %s260 = scalar_lea.vmem %s0, %s259
      $region48: #{basic_block_forward.1} parent=43 // pred_fallthru
        _
    $region44: #{basic_block_forward.1} parent=5 // pred_fallthru
      _
    %p261 = scmp.le.s32.totalorder 1, %s14
    %p262 = scmp.lt.s32.totalorder %s14, 3
    %p263 = pnand %p261, %p262
    %p264 = pneg %p263
    // Predicated region
    $region49: #{basic_block_forward.1} parent=5 // pred_check
      _
    $region50: #{basic_block_forward.1} parent=5 // pred_check_branch
      %266 = sbr.rel (%p263) target = $region52
    $region51: #{basic_block_forward.1} parent=5 // pred_region
      %s267 = ssub.s32 %s14, 1
      %p268 = scmp.lt.s32.totalorder %s19, 1
      %s269 = scalar_select %p268, %s19, 1
      %s270 = smul.addr %s269, 2
      %s271 = smul.addr %s270, 4
      %s272 = scalar_lea.vmem %s0, %s271
      %p273 = pneg %p40
      %p274 = pneg %p37
      %p275 = pneg %p61
      %p276 = pneg %p58
      %p277 = pneg %p82
      %p278 = pneg %p79
      %p279 = pneg %p103
      %p280 = pneg %p100
      %p281 = pneg %p124
      %p282 = pneg %p121
      %p283 = pneg %p145
      %p284 = pneg %p142
      %p285 = pneg %p166
      %p286 = pneg %p163
      %p287 = pneg %p187
      %p288 = pneg %p184
      %p289 = pneg %p213
      %p290 = pneg %p210
      %p291 = scmp.lt.s32.totalorder %s19, 1
      %s292 = scalar_select %p291, %s19, 1
      %s293 = smul.addr %s292, 2
      %s294 = smul.addr %s293, 4
      %s295 = scalar_lea.vmem %s8, %s294
      %p296 = scmp.lt.s32.totalorder %s19, 1
      %s297 = scalar_select %p296, %s19, 1
      %s298 = smul.addr %s297, 2
      %s299 = smul.addr %s298, 4
      %s300 = scalar_lea.vmem %s0, %s299
      %p301 = scmp.lt.s32.totalorder %s19, 1
      %s302 = scalar_select %p301, %s19, 1
      %s303 = smul.addr %s302, 2
      %s304 = smul.addr %s303, 4
      %s305 = scalar_lea.vmem %s8, %s304
      %v307 = vld [vmem:[%s300] sm:$0xff]
      %v309 = vcombine.high %v307, %v307
      %311 = vrot.lane.b32.xlu0 %v307, 17
      %v312 = vpop.permute.xlu0 %311
      %313 = vrot.lane.b32.xlu0 %v309, 17
      %v314 = vpop.permute.xlu0 %313
      %v315 = vlaneseq
      %v316 = vand.u32 %v315, 127
      %vm317 = vcmp.lt.s32.totalorder %v316, 17
      %v318 = vsel %vm317, %v312, %v314
      %v319 = vsel %vm317, %v314, %v312
      %v320 = vld [vmem:[%s3] sm:$0x3]
      %v322 = vlaneseq
      %v323 = vshrl.u32 %v322, 7
      %v324 = vsub.s32 0, %v323
      %v325 = vrot.slane %v320, %v324
      %v326 = vlaneseq
      %v327 = vshrl.u32 %v326, 7
      %v328 = vsub.s32 1, %v327
      %v329 = vrot.slane %v320, %v328
      %v332 = vmul.f32 %v319, %v325
      %v333 = vmul.f32 %v318, %v329
      %v334 = vld [vmem:[%s1] sm:$0x3]
      %v335 = vpack.c.bf16 %v332, %v332
      %v336 = vpack.c.bf16 %v333, %v333
      %337 = vrot.lane.b32.xlu0 %v307, 16
      %v338 = vpop.permute.xlu0 %337
      %339 = vrot.lane.b32.xlu0 %v309, 16
      %v340 = vpop.permute.xlu0 %339
      %vm341 = vcmp.lt.s32.totalorder %v316, 16
      %v342 = vsel %vm341, %v338, %v340
      %v343 = vsel %vm341, %v340, %v338
      %s344 = scalar_lea.vmem %s3, 2
      %v345 = vld [vmem:[%s344] sm:$0x3]
      %v347 = vlaneseq
      %v348 = vshrl.u32 %v347, 7
      %v349 = vsub.s32 0, %v348
      %v350 = vrot.slane %v345, %v349
      %v351 = vlaneseq
      %v352 = vshrl.u32 %v351, 7
      %v353 = vsub.s32 1, %v352
      %v354 = vrot.slane %v345, %v353
      %v357 = vmul.f32 %v343, %v350
      %v358 = vmul.f32 %v342, %v354
      %s359 = scalar_lea.vmem %s1, 2
      %v360 = vld [vmem:[%s359] sm:$0x3]
      %v361 = vpack.c.bf16 %v357, %v357
      %v362 = vpack.c.bf16 %v358, %v358
      %vm363 = vcmask 31744
      %v365 = vsel %vm363, %v360, 0
      %vm367 = vcmask 1041408
      %v369 = vsel %vm367, %v361, 0
      %v372 = vsel %vm367, %v362, 0
      %374 = vmatprep.subr.bf16.mxu0 0
      %375 = vmatpush1.bf16.msra.mxu0 0
      %376 = vmatprep.subr.bf16.mxu0 0
      %377 = vmatpush1.bf16.msra.mxu0 0
      %378 = vmatprep.subr.bf16.mxu0 0
      %379 = vmatpush1.bf16.msra.mxu0 0
      %380 = vmatprep.subr.bf16.mxu0 0
      %381 = vmatpush1.bf16.msra.mxu0 0
      %382 = vmatprep.subr.bf16.mxu0 0
      %383 = vmatpush1.bf16.msra.mxu0 0
      %384 = vmatprep.subr.bf16.mxu0 0
      %385 = vmatpush1.bf16.msra.mxu0 0
      %386 = vmatprep.subr.bf16.mxu0 0
      %387 = vmatpush1.bf16.msra.mxu0 0
      %388 = vmatprep.subr.bf16.mxu0 %v372
      %389 = vmatpush1.bf16.msra.mxu0 %v369
      %390 = vmatprep.subr.bf16.mxu0 0
      %391 = vmatpush2.bf16.msra.mxu0 0
      %392 = vmatprep.subr.bf16.mxu0 0
      %393 = vmatpush2.bf16.msra.mxu0 0
      %394 = vmatprep.subr.bf16.mxu0 0
      %395 = vmatpush2.bf16.msra.mxu0 0
      %396 = vmatprep.subr.bf16.mxu0 0
      %397 = vmatpush2.bf16.msra.mxu0 0
      %398 = vmatprep.subr.bf16.mxu0 0
      %399 = vmatpush2.bf16.msra.mxu0 0
      %400 = vmatprep.subr.bf16.mxu0 0
      %401 = vmatpush2.bf16.msra.mxu0 0
      %402 = vmatprep.subr.bf16.mxu0 0
      %403 = vmatpush2.bf16.msra.mxu0 0
      %404 = vmatprep.subr.bf16.mxu0 0
      %405 = vmatpush2.bf16.msra.mxu0 0
      %406 = vmatprep.mubr.bf16.mxu0 0
      %407 = vmatmul.mubr.bf16.gmra.mxu0 %v365
      %v408 = vpop.f32.mrf.mxu0
      %v409 = vadd.f32 0.0, %v408
      %v410 = vpop.f32.mrf.mxu0
      %v411 = vadd.f32 0.0, %v410
      %v412 = vpop.f32.mrf.mxu0
      %v413 = vpop.f32.mrf.mxu0
      %414 = vdwg.mxu0
      %v416 = vsel %vm363, %v334, 0
      %v419 = vsel %vm367, %v335, 0
      %v422 = vsel %vm367, %v336, 0
      %424 = vmatprep.subr.bf16.mxu0 0
      %425 = vmatpush1.bf16.msra.mxu0 0
      %426 = vmatprep.subr.bf16.mxu0 0
      %427 = vmatpush1.bf16.msra.mxu0 0
      %428 = vmatprep.subr.bf16.mxu0 0
      %429 = vmatpush1.bf16.msra.mxu0 0
      %430 = vmatprep.subr.bf16.mxu0 0
      %431 = vmatpush1.bf16.msra.mxu0 0
      %432 = vmatprep.subr.bf16.mxu0 0
      %433 = vmatpush1.bf16.msra.mxu0 0
      %434 = vmatprep.subr.bf16.mxu0 0
      %435 = vmatpush1.bf16.msra.mxu0 0
      %436 = vmatprep.subr.bf16.mxu0 0
      %437 = vmatpush1.bf16.msra.mxu0 0
      %438 = vmatprep.subr.bf16.mxu0 %v422
      %439 = vmatpush1.bf16.msra.mxu0 %v419
      %440 = vmatprep.subr.bf16.mxu0 0
      %441 = vmatpush2.bf16.msra.mxu0 0
      %442 = vmatprep.subr.bf16.mxu0 0
      %443 = vmatpush2.bf16.msra.mxu0 0
      %444 = vmatprep.subr.bf16.mxu0 0
      %445 = vmatpush2.bf16.msra.mxu0 0
      %446 = vmatprep.subr.bf16.mxu0 0
      %447 = vmatpush2.bf16.msra.mxu0 0
      %448 = vmatprep.subr.bf16.mxu0 0
      %449 = vmatpush2.bf16.msra.mxu0 0
      %450 = vmatprep.subr.bf16.mxu0 0
      %451 = vmatpush2.bf16.msra.mxu0 0
      %452 = vmatprep.subr.bf16.mxu0 0
      %453 = vmatpush2.bf16.msra.mxu0 0
      %454 = vmatprep.subr.bf16.mxu0 0
      %455 = vmatpush2.bf16.msra.mxu0 0
      %456 = vmatprep.mubr.bf16.mxu0 0
      %457 = vmatmul.mubr.bf16.gmra.mxu0 %v416
      %v458 = vpop.f32.mrf.mxu0
      %v459 = vadd.f32 %v409, %v458
      %v460 = vpop.f32.mrf.mxu0
      %v461 = vadd.f32 %v411, %v460
      %v462 = vpop.f32.mrf.mxu0
      %v463 = vpop.f32.mrf.mxu0
      %464 = vdwg.mxu0
      %465 = vrot.lane.b32.xlu0 %v307, 15
      %v466 = vpop.permute.xlu0 %465
      %467 = vrot.lane.b32.xlu0 %v309, 15
      %v468 = vpop.permute.xlu0 %467
      %vm469 = vcmp.lt.s32.totalorder %v316, 15
      %v470 = vsel %vm469, %v466, %v468
      %v471 = vsel %vm469, %v468, %v466
      %s472 = scalar_lea.vmem %s3, 4
      %v473 = vld [vmem:[%s472] sm:$0x3]
      %v475 = vlaneseq
      %v476 = vshrl.u32 %v475, 7
      %v477 = vsub.s32 0, %v476
      %v478 = vrot.slane %v473, %v477
      %v479 = vlaneseq
      %v480 = vshrl.u32 %v479, 7
      %v481 = vsub.s32 1, %v480
      %v482 = vrot.slane %v473, %v481
      %v485 = vmul.f32 %v471, %v478
      %v486 = vmul.f32 %v470, %v482
      %s487 = scalar_lea.vmem %s1, 4
      %v488 = vld [vmem:[%s487] sm:$0x3]
      %v489 = vpack.c.bf16 %v485, %v485
      %v490 = vpack.c.bf16 %v486, %v486
      %v492 = vsel %vm363, %v488, 0
      %v495 = vsel %vm367, %v489, 0
      %v498 = vsel %vm367, %v490, 0
      %500 = vmatprep.subr.bf16.mxu0 0
      %501 = vmatpush1.bf16.msra.mxu0 0
      %502 = vmatprep.subr.bf16.mxu0 0
      %503 = vmatpush1.bf16.msra.mxu0 0
      %504 = vmatprep.subr.bf16.mxu0 0
      %505 = vmatpush1.bf16.msra.mxu0 0
      %506 = vmatprep.subr.bf16.mxu0 0
      %507 = vmatpush1.bf16.msra.mxu0 0
      %508 = vmatprep.subr.bf16.mxu0 0
      %509 = vmatpush1.bf16.msra.mxu0 0
      %510 = vmatprep.subr.bf16.mxu0 0
      %511 = vmatpush1.bf16.msra.mxu0 0
      %512 = vmatprep.subr.bf16.mxu0 0
      %513 = vmatpush1.bf16.msra.mxu0 0
      %514 = vmatprep.subr.bf16.mxu0 %v498
      %515 = vmatpush1.bf16.msra.mxu0 %v495
      %516 = vmatprep.subr.bf16.mxu0 0
      %517 = vmatpush2.bf16.msra.mxu0 0
      %518 = vmatprep.subr.bf16.mxu0 0
      %519 = vmatpush2.bf16.msra.mxu0 0
      %520 = vmatprep.subr.bf16.mxu0 0
      %521 = vmatpush2.bf16.msra.mxu0 0
      %522 = vmatprep.subr.bf16.mxu0 0
      %523 = vmatpush2.bf16.msra.mxu0 0
      %524 = vmatprep.subr.bf16.mxu0 0
      %525 = vmatpush2.bf16.msra.mxu0 0
      %526 = vmatprep.subr.bf16.mxu0 0
      %527 = vmatpush2.bf16.msra.mxu0 0
      %528 = vmatprep.subr.bf16.mxu0 0
      %529 = vmatpush2.bf16.msra.mxu0 0
      %530 = vmatprep.subr.bf16.mxu0 0
      %531 = vmatpush2.bf16.msra.mxu0 0
      %532 = vmatprep.mubr.bf16.mxu0 0
      %533 = vmatmul.mubr.bf16.gmra.mxu0 %v492
      %v534 = vpop.f32.mrf.mxu0
      %v535 = vadd.f32 0.0, %v534
      %v536 = vpop.f32.mrf.mxu0
      %v537 = vadd.f32 0.0, %v536
      %v538 = vpop.f32.mrf.mxu0
      %v539 = vpop.f32.mrf.mxu0
      %540 = vdwg.mxu0
      %v541 = vadd.f32 %v459, %v535
      %v542 = vadd.f32 %v461, %v537
      %543 = vrot.lane.b32.xlu0 %v307, 1
      %v544 = vpop.permute.xlu0 %543
      %545 = vrot.lane.b32.xlu0 %v309, 1
      %v546 = vpop.permute.xlu0 %545
      %vm547 = vcmp.lt.s32.totalorder %v316, 1
      %v548 = vsel %vm547, %v544, %v546
      %v549 = vsel %vm547, %v546, %v544
      %s550 = scalar_lea.vmem %s3, 6
      %v551 = vld [vmem:[%s550] sm:$0x3]
      %v553 = vlaneseq
      %v554 = vshrl.u32 %v553, 7
      %v555 = vsub.s32 0, %v554
      %v556 = vrot.slane %v551, %v555
      %v557 = vlaneseq
      %v558 = vshrl.u32 %v557, 7
      %v559 = vsub.s32 1, %v558
      %v560 = vrot.slane %v551, %v559
      %v563 = vmul.f32 %v549, %v556
      %v564 = vmul.f32 %v548, %v560
      %s565 = scalar_lea.vmem %s1, 6
      %v566 = vld [vmem:[%s565] sm:$0x3]
      %v567 = vpack.c.bf16 %v563, %v563
      %v568 = vpack.c.bf16 %v564, %v564
      %v570 = vsel %vm363, %v566, 0
      %v573 = vsel %vm367, %v567, 0
      %v576 = vsel %vm367, %v568, 0
      %578 = vmatprep.subr.bf16.mxu0 0
      %579 = vmatpush1.bf16.msra.mxu0 0
      %580 = vmatprep.subr.bf16.mxu0 0
      %581 = vmatpush1.bf16.msra.mxu0 0
      %582 = vmatprep.subr.bf16.mxu0 0
      %583 = vmatpush1.bf16.msra.mxu0 0
      %584 = vmatprep.subr.bf16.mxu0 0
      %585 = vmatpush1.bf16.msra.mxu0 0
      %586 = vmatprep.subr.bf16.mxu0 0
      %587 = vmatpush1.bf16.msra.mxu0 0
      %588 = vmatprep.subr.bf16.mxu0 0
      %589 = vmatpush1.bf16.msra.mxu0 0
      %590 = vmatprep.subr.bf16.mxu0 0
      %591 = vmatpush1.bf16.msra.mxu0 0
      %592 = vmatprep.subr.bf16.mxu0 %v576
      %593 = vmatpush1.bf16.msra.mxu0 %v573
      %594 = vmatprep.subr.bf16.mxu0 0
      %595 = vmatpush2.bf16.msra.mxu0 0
      %596 = vmatprep.subr.bf16.mxu0 0
      %597 = vmatpush2.bf16.msra.mxu0 0
      %598 = vmatprep.subr.bf16.mxu0 0
      %599 = vmatpush2.bf16.msra.mxu0 0
      %600 = vmatprep.subr.bf16.mxu0 0
      %601 = vmatpush2.bf16.msra.mxu0 0
      %602 = vmatprep.subr.bf16.mxu0 0
      %603 = vmatpush2.bf16.msra.mxu0 0
      %604 = vmatprep.subr.bf16.mxu0 0
      %605 = vmatpush2.bf16.msra.mxu0 0
      %606 = vmatprep.subr.bf16.mxu0 0
      %607 = vmatpush2.bf16.msra.mxu0 0
      %608 = vmatprep.subr.bf16.mxu0 0
      %609 = vmatpush2.bf16.msra.mxu0 0
      %610 = vmatprep.mubr.bf16.mxu0 0
      %611 = vmatmul.mubr.bf16.gmra.mxu0 %v570
      %v612 = vpop.f32.mrf.mxu0
      %v613 = vadd.f32 0.0, %v612
      %v614 = vpop.f32.mrf.mxu0
      %v615 = vadd.f32 0.0, %v614
      %v616 = vpop.f32.mrf.mxu0
      %v617 = vpop.f32.mrf.mxu0
      %618 = vdwg.mxu0
      %v619 = vadd.f32 %v541, %v613
      %v620 = vadd.f32 %v542, %v615
      %s621 = scalar_lea.vmem %s1, 8
      %v622 = vld [vmem:[%s621] sm:$0x3]
      %v623 = vpack.c.bf16 %v307, %v307
      %v624 = vpack.c.bf16 %v309, %v309
      %v626 = vsel %vm363, %v622, 0
      %v629 = vsel %vm367, %v623, 0
      %v632 = vsel %vm367, %v624, 0
      %634 = vmatprep.subr.bf16.mxu0 0
      %635 = vmatpush1.bf16.msra.mxu0 0
      %636 = vmatprep.subr.bf16.mxu0 0
      %637 = vmatpush1.bf16.msra.mxu0 0
      %638 = vmatprep.subr.bf16.mxu0 0
      %639 = vmatpush1.bf16.msra.mxu0 0
      %640 = vmatprep.subr.bf16.mxu0 0
      %641 = vmatpush1.bf16.msra.mxu0 0
      %642 = vmatprep.subr.bf16.mxu0 0
      %643 = vmatpush1.bf16.msra.mxu0 0
      %644 = vmatprep.subr.bf16.mxu0 0
      %645 = vmatpush1.bf16.msra.mxu0 0
      %646 = vmatprep.subr.bf16.mxu0 0
      %647 = vmatpush1.bf16.msra.mxu0 0
      %648 = vmatprep.subr.bf16.mxu0 %v632
      %649 = vmatpush1.bf16.msra.mxu0 %v629
      %650 = vmatprep.subr.bf16.mxu0 0
      %651 = vmatpush2.bf16.msra.mxu0 0
      %652 = vmatprep.subr.bf16.mxu0 0
      %653 = vmatpush2.bf16.msra.mxu0 0
      %654 = vmatprep.subr.bf16.mxu0 0
      %655 = vmatpush2.bf16.msra.mxu0 0
      %656 = vmatprep.subr.bf16.mxu0 0
      %657 = vmatpush2.bf16.msra.mxu0 0
      %658 = vmatprep.subr.bf16.mxu0 0
      %659 = vmatpush2.bf16.msra.mxu0 0
      %660 = vmatprep.subr.bf16.mxu0 0
      %661 = vmatpush2.bf16.msra.mxu0 0
      %662 = vmatprep.subr.bf16.mxu0 0
      %663 = vmatpush2.bf16.msra.mxu0 0
      %664 = vmatprep.subr.bf16.mxu0 0
      %665 = vmatpush2.bf16.msra.mxu0 0
      %666 = vmatprep.mubr.bf16.mxu0 0
      %667 = vmatmul.mubr.bf16.gmra.mxu0 %v626
      %v668 = vpop.f32.mrf.mxu0
      %v669 = vadd.f32 0.0, %v668
      %v670 = vpop.f32.mrf.mxu0
      %v671 = vadd.f32 0.0, %v670
      %v672 = vpop.f32.mrf.mxu0
      %v673 = vpop.f32.mrf.mxu0
      %674 = vdwg.mxu0
      %v675 = vadd.f32 %v619, %v669
      %v676 = vadd.f32 %v620, %v671
      %677 = vrot.lane.b32.xlu0 %v307, 127
      %v678 = vpop.permute.xlu0 %677
      %679 = vrot.lane.b32.xlu0 %v309, 127
      %v680 = vpop.permute.xlu0 %679
      %vm681 = vcmp.lt.s32.totalorder %v316, 127
      %v682 = vsel %vm681, %v678, %v680
      %v683 = vsel %vm681, %v680, %v678
      %s684 = scalar_lea.vmem %s3, 10
      %v685 = vld [vmem:[%s684] sm:$0x3]
      %v687 = vlaneseq
      %v688 = vshrl.u32 %v687, 7
      %v689 = vsub.s32 0, %v688
      %v690 = vrot.slane %v685, %v689
      %v691 = vlaneseq
      %v692 = vshrl.u32 %v691, 7
      %v693 = vsub.s32 1, %v692
      %v694 = vrot.slane %v685, %v693
      %v697 = vmul.f32 %v682, %v690
      %v698 = vmul.f32 %v683, %v694
      %s699 = scalar_lea.vmem %s1, 10
      %v700 = vld [vmem:[%s699] sm:$0x3]
      %v701 = vpack.c.bf16 %v697, %v697
      %v702 = vpack.c.bf16 %v698, %v698
      %v704 = vsel %vm363, %v700, 0
      %v707 = vsel %vm367, %v701, 0
      %v710 = vsel %vm367, %v702, 0
      %712 = vmatprep.subr.bf16.mxu0 0
      %713 = vmatpush1.bf16.msra.mxu0 0
      %714 = vmatprep.subr.bf16.mxu0 0
      %715 = vmatpush1.bf16.msra.mxu0 0
      %716 = vmatprep.subr.bf16.mxu0 0
      %717 = vmatpush1.bf16.msra.mxu0 0
      %718 = vmatprep.subr.bf16.mxu0 0
      %719 = vmatpush1.bf16.msra.mxu0 0
      %720 = vmatprep.subr.bf16.mxu0 0
      %721 = vmatpush1.bf16.msra.mxu0 0
      %722 = vmatprep.subr.bf16.mxu0 0
      %723 = vmatpush1.bf16.msra.mxu0 0
      %724 = vmatprep.subr.bf16.mxu0 0
      %725 = vmatpush1.bf16.msra.mxu0 0
      %726 = vmatprep.subr.bf16.mxu0 %v710
      %727 = vmatpush1.bf16.msra.mxu0 %v707
      %728 = vmatprep.subr.bf16.mxu0 0
      %729 = vmatpush2.bf16.msra.mxu0 0
      %730 = vmatprep.subr.bf16.mxu0 0
      %731 = vmatpush2.bf16.msra.mxu0 0
      %732 = vmatprep.subr.bf16.mxu0 0
      %733 = vmatpush2.bf16.msra.mxu0 0
      %734 = vmatprep.subr.bf16.mxu0 0
      %735 = vmatpush2.bf16.msra.mxu0 0
      %736 = vmatprep.subr.bf16.mxu0 0
      %737 = vmatpush2.bf16.msra.mxu0 0
      %738 = vmatprep.subr.bf16.mxu0 0
      %739 = vmatpush2.bf16.msra.mxu0 0
      %740 = vmatprep.subr.bf16.mxu0 0
      %741 = vmatpush2.bf16.msra.mxu0 0
      %742 = vmatprep.subr.bf16.mxu0 0
      %743 = vmatpush2.bf16.msra.mxu0 0
      %744 = vmatprep.mubr.bf16.mxu0 0
      %745 = vmatmul.mubr.bf16.gmra.mxu0 %v704
      %v746 = vpop.f32.mrf.mxu0
      %v747 = vadd.f32 0.0, %v746
      %v748 = vpop.f32.mrf.mxu0
      %v749 = vadd.f32 0.0, %v748
      %v750 = vpop.f32.mrf.mxu0
      %v751 = vpop.f32.mrf.mxu0
      %752 = vdwg.mxu0
      %v753 = vadd.f32 %v675, %v747
      %v754 = vadd.f32 %v676, %v749
      %755 = vrot.lane.b32.xlu0 %v307, 113
      %v756 = vpop.permute.xlu0 %755
      %757 = vrot.lane.b32.xlu0 %v309, 113
      %v758 = vpop.permute.xlu0 %757
      %vm759 = vcmp.lt.s32.totalorder %v316, 113
      %v760 = vsel %vm759, %v756, %v758
      %v761 = vsel %vm759, %v758, %v756
      %s762 = scalar_lea.vmem %s3, 12
      %v763 = vld [vmem:[%s762] sm:$0x3]
      %v765 = vlaneseq
      %v766 = vshrl.u32 %v765, 7
      %v767 = vsub.s32 0, %v766
      %v768 = vrot.slane %v763, %v767
      %v769 = vlaneseq
      %v770 = vshrl.u32 %v769, 7
      %v771 = vsub.s32 1, %v770
      %v772 = vrot.slane %v763, %v771
      %v775 = vmul.f32 %v760, %v768
      %v776 = vmul.f32 %v761, %v772
      %s777 = scalar_lea.vmem %s1, 12
      %v778 = vld [vmem:[%s777] sm:$0x3]
      %v779 = vpack.c.bf16 %v775, %v775
      %v780 = vpack.c.bf16 %v776, %v776
      %v782 = vsel %vm363, %v778, 0
      %v785 = vsel %vm367, %v779, 0
      %v788 = vsel %vm367, %v780, 0
      %790 = vmatprep.subr.bf16.mxu0 0
      %791 = vmatpush1.bf16.msra.mxu0 0
      %792 = vmatprep.subr.bf16.mxu0 0
      %793 = vmatpush1.bf16.msra.mxu0 0
      %794 = vmatprep.subr.bf16.mxu0 0
      %795 = vmatpush1.bf16.msra.mxu0 0
      %796 = vmatprep.subr.bf16.mxu0 0
      %797 = vmatpush1.bf16.msra.mxu0 0
      %798 = vmatprep.subr.bf16.mxu0 0
      %799 = vmatpush1.bf16.msra.mxu0 0
      %800 = vmatprep.subr.bf16.mxu0 0
      %801 = vmatpush1.bf16.msra.mxu0 0
      %802 = vmatprep.subr.bf16.mxu0 0
      %803 = vmatpush1.bf16.msra.mxu0 0
      %804 = vmatprep.subr.bf16.mxu0 %v788
      %805 = vmatpush1.bf16.msra.mxu0 %v785
      %806 = vmatprep.subr.bf16.mxu0 0
      %807 = vmatpush2.bf16.msra.mxu0 0
      %808 = vmatprep.subr.bf16.mxu0 0
      %809 = vmatpush2.bf16.msra.mxu0 0
      %810 = vmatprep.subr.bf16.mxu0 0
      %811 = vmatpush2.bf16.msra.mxu0 0
      %812 = vmatprep.subr.bf16.mxu0 0
      %813 = vmatpush2.bf16.msra.mxu0 0
      %814 = vmatprep.subr.bf16.mxu0 0
      %815 = vmatpush2.bf16.msra.mxu0 0
      %816 = vmatprep.subr.bf16.mxu0 0
      %817 = vmatpush2.bf16.msra.mxu0 0
      %818 = vmatprep.subr.bf16.mxu0 0
      %819 = vmatpush2.bf16.msra.mxu0 0
      %820 = vmatprep.subr.bf16.mxu0 0
      %821 = vmatpush2.bf16.msra.mxu0 0
      %822 = vmatprep.mubr.bf16.mxu0 0
      %823 = vmatmul.mubr.bf16.gmra.mxu0 %v782
      %v824 = vpop.f32.mrf.mxu0
      %v825 = vadd.f32 0.0, %v824
      %v826 = vpop.f32.mrf.mxu0
      %v827 = vadd.f32 0.0, %v826
      %v828 = vpop.f32.mrf.mxu0
      %v829 = vpop.f32.mrf.mxu0
      %830 = vdwg.mxu0
      %v831 = vadd.f32 %v753, %v825
      %v832 = vadd.f32 %v754, %v827
      %833 = vrot.lane.b32.xlu0 %v307, 112
      %v834 = vpop.permute.xlu0 %833
      %835 = vrot.lane.b32.xlu0 %v309, 112
      %v836 = vpop.permute.xlu0 %835
      %vm837 = vcmp.lt.s32.totalorder %v316, 112
      %v838 = vsel %vm837, %v834, %v836
      %v839 = vsel %vm837, %v836, %v834
      %s840 = scalar_lea.vmem %s3, 14
      %v841 = vld [vmem:[%s840] sm:$0x3]
      %v843 = vlaneseq
      %v844 = vshrl.u32 %v843, 7
      %v845 = vsub.s32 0, %v844
      %v846 = vrot.slane %v841, %v845
      %v847 = vlaneseq
      %v848 = vshrl.u32 %v847, 7
      %v849 = vsub.s32 1, %v848
      %v850 = vrot.slane %v841, %v849
      %v853 = vmul.f32 %v838, %v846
      %v854 = vmul.f32 %v839, %v850
      %s855 = scalar_lea.vmem %s1, 14
      %v856 = vld [vmem:[%s855] sm:$0x3]
      %v857 = vpack.c.bf16 %v853, %v853
      %v858 = vpack.c.bf16 %v854, %v854
      %v860 = vsel %vm363, %v856, 0
      %v863 = vsel %vm367, %v857, 0
      %v866 = vsel %vm367, %v858, 0
      %868 = vmatprep.subr.bf16.mxu0 0
      %869 = vmatpush1.bf16.msra.mxu0 0
      %870 = vmatprep.subr.bf16.mxu0 0
      %871 = vmatpush1.bf16.msra.mxu0 0
      %872 = vmatprep.subr.bf16.mxu0 0
      %873 = vmatpush1.bf16.msra.mxu0 0
      %874 = vmatprep.subr.bf16.mxu0 0
      %875 = vmatpush1.bf16.msra.mxu0 0
      %876 = vmatprep.subr.bf16.mxu0 0
      %877 = vmatpush1.bf16.msra.mxu0 0
      %878 = vmatprep.subr.bf16.mxu0 0
      %879 = vmatpush1.bf16.msra.mxu0 0
      %880 = vmatprep.subr.bf16.mxu0 0
      %881 = vmatpush1.bf16.msra.mxu0 0
      %882 = vmatprep.subr.bf16.mxu0 %v866
      %883 = vmatpush1.bf16.msra.mxu0 %v863
      %884 = vmatprep.subr.bf16.mxu0 0
      %885 = vmatpush2.bf16.msra.mxu0 0
      %886 = vmatprep.subr.bf16.mxu0 0
      %887 = vmatpush2.bf16.msra.mxu0 0
      %888 = vmatprep.subr.bf16.mxu0 0
      %889 = vmatpush2.bf16.msra.mxu0 0
      %890 = vmatprep.subr.bf16.mxu0 0
      %891 = vmatpush2.bf16.msra.mxu0 0
      %892 = vmatprep.subr.bf16.mxu0 0
      %893 = vmatpush2.bf16.msra.mxu0 0
      %894 = vmatprep.subr.bf16.mxu0 0
      %895 = vmatpush2.bf16.msra.mxu0 0
      %896 = vmatprep.subr.bf16.mxu0 0
      %897 = vmatpush2.bf16.msra.mxu0 0
      %898 = vmatprep.subr.bf16.mxu0 0
      %899 = vmatpush2.bf16.msra.mxu0 0
      %900 = vmatprep.mubr.bf16.mxu0 0
      %901 = vmatmul.mubr.bf16.gmra.mxu0 %v860
      %v902 = vpop.f32.mrf.mxu0
      %v903 = vadd.f32 0.0, %v902
      %v904 = vpop.f32.mrf.mxu0
      %v905 = vadd.f32 0.0, %v904
      %v906 = vpop.f32.mrf.mxu0
      %v907 = vpop.f32.mrf.mxu0
      %908 = vdwg.mxu0
      %v909 = vadd.f32 %v831, %v903
      %v910 = vadd.f32 %v832, %v905
      %911 = vrot.lane.b32.xlu0 %v307, 111
      %v912 = vpop.permute.xlu0 %911
      %913 = vrot.lane.b32.xlu0 %v309, 111
      %v914 = vpop.permute.xlu0 %913
      %vm915 = vcmp.lt.s32.totalorder %v316, 111
      %v916 = vsel %vm915, %v912, %v914
      %v917 = vsel %vm915, %v914, %v912
      %s918 = scalar_lea.vmem %s3, 16
      %v919 = vld [vmem:[%s918] sm:$0x3]
      %v921 = vlaneseq
      %v922 = vshrl.u32 %v921, 7
      %v923 = vsub.s32 0, %v922
      %v924 = vrot.slane %v919, %v923
      %v925 = vlaneseq
      %v926 = vshrl.u32 %v925, 7
      %v927 = vsub.s32 1, %v926
      %v928 = vrot.slane %v919, %v927
      %v931 = vmul.f32 %v916, %v924
      %v932 = vmul.f32 %v917, %v928
      %s933 = scalar_lea.vmem %s1, 16
      %v934 = vld [vmem:[%s933] sm:$0x3]
      %v935 = vpack.c.bf16 %v931, %v931
      %v936 = vpack.c.bf16 %v932, %v932
      %v938 = vsel %vm363, %v934, 0
      %v941 = vsel %vm367, %v935, 0
      %v944 = vsel %vm367, %v936, 0
      %946 = vmatprep.subr.bf16.mxu0 0
      %947 = vmatpush1.bf16.msra.mxu0 0
      %948 = vmatprep.subr.bf16.mxu0 0
      %949 = vmatpush1.bf16.msra.mxu0 0
      %950 = vmatprep.subr.bf16.mxu0 0
      %951 = vmatpush1.bf16.msra.mxu0 0
      %952 = vmatprep.subr.bf16.mxu0 0
      %953 = vmatpush1.bf16.msra.mxu0 0
      %954 = vmatprep.subr.bf16.mxu0 0
      %955 = vmatpush1.bf16.msra.mxu0 0
      %956 = vmatprep.subr.bf16.mxu0 0
      %957 = vmatpush1.bf16.msra.mxu0 0
      %958 = vmatprep.subr.bf16.mxu0 0
      %959 = vmatpush1.bf16.msra.mxu0 0
      %960 = vmatprep.subr.bf16.mxu0 %v944
      %961 = vmatpush1.bf16.msra.mxu0 %v941
      %962 = vmatprep.subr.bf16.mxu0 0
      %963 = vmatpush2.bf16.msra.mxu0 0
      %964 = vmatprep.subr.bf16.mxu0 0
      %965 = vmatpush2.bf16.msra.mxu0 0
      %966 = vmatprep.subr.bf16.mxu0 0
      %967 = vmatpush2.bf16.msra.mxu0 0
      %968 = vmatprep.subr.bf16.mxu0 0
      %969 = vmatpush2.bf16.msra.mxu0 0
      %970 = vmatprep.subr.bf16.mxu0 0
      %971 = vmatpush2.bf16.msra.mxu0 0
      %972 = vmatprep.subr.bf16.mxu0 0
      %973 = vmatpush2.bf16.msra.mxu0 0
      %974 = vmatprep.subr.bf16.mxu0 0
      %975 = vmatpush2.bf16.msra.mxu0 0
      %976 = vmatprep.subr.bf16.mxu0 0
      %977 = vmatpush2.bf16.msra.mxu0 0
      %978 = vmatprep.mubr.bf16.mxu0 0
      %979 = vmatmul.mubr.bf16.gmra.mxu0 %v938
      %v980 = vpop.f32.mrf.mxu0
      %v981 = vadd.f32 0.0, %v980
      %v982 = vpop.f32.mrf.mxu0
      %v983 = vadd.f32 0.0, %v982
      %v984 = vpop.f32.mrf.mxu0
      %v985 = vpop.f32.mrf.mxu0
      %986 = vdwg.mxu0
      %v987 = vadd.f32 %v909, %v981
      %v988 = vadd.f32 %v910, %v983
      %v989 = vld [vmem:[%s4] sm:$0xf]
      %991 = vset.pattern.permute.xlu0 0
      %992 = vperm.xlu0 %991, %v989
      %v993 = vpop.permute.xlu0 %992
      %v995 = vmul.f32 %v987, %v993
      %v996 = vmul.f32 %v988, %v993
      %v997 = vld [vmem:[%s5] sm:$0xf]
      %999 = vset.pattern.permute.xlu0 0
      %1000 = vperm.xlu0 %999, %v997
      %v1001 = vpop.permute.xlu0 %1000
      %v1003 = vadd.f32 %v995, %v1001
      %v1004 = vadd.f32 %v996, %v1001
      %v1005 = vmax.f32 %v1003, 0.0
      %v1006 = vmax.f32 %v1004, 0.0
      %1007 = vrot.lane.b32.xlu0 %v1005, 17
      %v1008 = vpop.permute.xlu0 %1007
      %1009 = vrot.lane.b32.xlu0 %v1006, 17
      %v1010 = vpop.permute.xlu0 %1009
      %v1011 = vsel %vm317, %v1008, %v1010
      %v1012 = vsel %vm317, %v1010, %v1008
      %v1013 = vmul.f32 %v1012, %v325
      %v1014 = vmul.f32 %v1011, %v329
      %v1015 = vld [vmem:[%s2] sm:$0x3]
      %v1016 = vpack.c.bf16 %v1013, %v1013
      %v1017 = vpack.c.bf16 %v1014, %v1014
      %1018 = vrot.lane.b32.xlu0 %v1005, 16
      %v1019 = vpop.permute.xlu0 %1018
      %1020 = vrot.lane.b32.xlu0 %v1006, 16
      %v1021 = vpop.permute.xlu0 %1020
      %v1022 = vsel %vm341, %v1019, %v1021
      %v1023 = vsel %vm341, %v1021, %v1019
      %v1024 = vmul.f32 %v1023, %v350
      %v1025 = vmul.f32 %v1022, %v354
      %s1026 = scalar_lea.vmem %s2, 2
      %v1027 = vld [vmem:[%s1026] sm:$0x3]
      %v1028 = vpack.c.bf16 %v1024, %v1024
      %v1029 = vpack.c.bf16 %v1025, %v1025
      %v1031 = vsel %vm363, %v1027, 0
      %v1034 = vsel %vm367, %v1028, 0
      %v1037 = vsel %vm367, %v1029, 0
      %1039 = vmatprep.subr.bf16.mxu0 0
      %1040 = vmatpush1.bf16.msra.mxu0 0
      %1041 = vmatprep.subr.bf16.mxu0 0
      %1042 = vmatpush1.bf16.msra.mxu0 0
      %1043 = vmatprep.subr.bf16.mxu0 0
      %1044 = vmatpush1.bf16.msra.mxu0 0
      %1045 = vmatprep.subr.bf16.mxu0 0
      %1046 = vmatpush1.bf16.msra.mxu0 0
      %1047 = vmatprep.subr.bf16.mxu0 0
      %1048 = vmatpush1.bf16.msra.mxu0 0
      %1049 = vmatprep.subr.bf16.mxu0 0
      %1050 = vmatpush1.bf16.msra.mxu0 0
      %1051 = vmatprep.subr.bf16.mxu0 0
      %1052 = vmatpush1.bf16.msra.mxu0 0
      %1053 = vmatprep.subr.bf16.mxu0 %v1037
      %1054 = vmatpush1.bf16.msra.mxu0 %v1034
      %1055 = vmatprep.subr.bf16.mxu0 0
      %1056 = vmatpush2.bf16.msra.mxu0 0
      %1057 = vmatprep.subr.bf16.mxu0 0
      %1058 = vmatpush2.bf16.msra.mxu0 0
      %1059 = vmatprep.subr.bf16.mxu0 0
      %1060 = vmatpush2.bf16.msra.mxu0 0
      %1061 = vmatprep.subr.bf16.mxu0 0
      %1062 = vmatpush2.bf16.msra.mxu0 0
      %1063 = vmatprep.subr.bf16.mxu0 0
      %1064 = vmatpush2.bf16.msra.mxu0 0
      %1065 = vmatprep.subr.bf16.mxu0 0
      %1066 = vmatpush2.bf16.msra.mxu0 0
      %1067 = vmatprep.subr.bf16.mxu0 0
      %1068 = vmatpush2.bf16.msra.mxu0 0
      %1069 = vmatprep.subr.bf16.mxu0 0
      %1070 = vmatpush2.bf16.msra.mxu0 0
      %1071 = vmatprep.mubr.bf16.mxu0 0
      %1072 = vmatmul.mubr.bf16.gmra.mxu0 %v1031
      %v1073 = vpop.f32.mrf.mxu0
      %v1074 = vadd.f32 0.0, %v1073
      %v1075 = vpop.f32.mrf.mxu0
      %v1076 = vadd.f32 0.0, %v1075
      %v1077 = vpop.f32.mrf.mxu0
      %v1078 = vpop.f32.mrf.mxu0
      %1079 = vdwg.mxu0
      %v1081 = vsel %vm363, %v1015, 0
      %v1084 = vsel %vm367, %v1016, 0
      %v1087 = vsel %vm367, %v1017, 0
      %1089 = vmatprep.subr.bf16.mxu0 0
      %1090 = vmatpush1.bf16.msra.mxu0 0
      %1091 = vmatprep.subr.bf16.mxu0 0
      %1092 = vmatpush1.bf16.msra.mxu0 0
      %1093 = vmatprep.subr.bf16.mxu0 0
      %1094 = vmatpush1.bf16.msra.mxu0 0
      %1095 = vmatprep.subr.bf16.mxu0 0
      %1096 = vmatpush1.bf16.msra.mxu0 0
      %1097 = vmatprep.subr.bf16.mxu0 0
      %1098 = vmatpush1.bf16.msra.mxu0 0
      %1099 = vmatprep.subr.bf16.mxu0 0
      %1100 = vmatpush1.bf16.msra.mxu0 0
      %1101 = vmatprep.subr.bf16.mxu0 0
      %1102 = vmatpush1.bf16.msra.mxu0 0
      %1103 = vmatprep.subr.bf16.mxu0 %v1087
      %1104 = vmatpush1.bf16.msra.mxu0 %v1084
      %1105 = vmatprep.subr.bf16.mxu0 0
      %1106 = vmatpush2.bf16.msra.mxu0 0
      %1107 = vmatprep.subr.bf16.mxu0 0
      %1108 = vmatpush2.bf16.msra.mxu0 0
      %1109 = vmatprep.subr.bf16.mxu0 0
      %1110 = vmatpush2.bf16.msra.mxu0 0
      %1111 = vmatprep.subr.bf16.mxu0 0
      %1112 = vmatpush2.bf16.msra.mxu0 0
      %1113 = vmatprep.subr.bf16.mxu0 0
      %1114 = vmatpush2.bf16.msra.mxu0 0
      %1115 = vmatprep.subr.bf16.mxu0 0
      %1116 = vmatpush2.bf16.msra.mxu0 0
      %1117 = vmatprep.subr.bf16.mxu0 0
      %1118 = vmatpush2.bf16.msra.mxu0 0
      %1119 = vmatprep.subr.bf16.mxu0 0
      %1120 = vmatpush2.bf16.msra.mxu0 0
      %1121 = vmatprep.mubr.bf16.mxu0 0
      %1122 = vmatmul.mubr.bf16.gmra.mxu0 %v1081
      %v1123 = vpop.f32.mrf.mxu0
      %v1124 = vadd.f32 %v1074, %v1123
      %v1125 = vpop.f32.mrf.mxu0
      %v1126 = vadd.f32 %v1076, %v1125
      %v1127 = vpop.f32.mrf.mxu0
      %v1128 = vpop.f32.mrf.mxu0
      %1129 = vdwg.mxu0
      %1130 = vrot.lane.b32.xlu0 %v1005, 15
      %v1131 = vpop.permute.xlu0 %1130
      %1132 = vrot.lane.b32.xlu0 %v1006, 15
      %v1133 = vpop.permute.xlu0 %1132
      %v1134 = vsel %vm469, %v1131, %v1133
      %v1135 = vsel %vm469, %v1133, %v1131
      %v1136 = vmul.f32 %v1135, %v478
      %v1137 = vmul.f32 %v1134, %v482
      %s1138 = scalar_lea.vmem %s2, 4
      %v1139 = vld [vmem:[%s1138] sm:$0x3]
      %v1140 = vpack.c.bf16 %v1136, %v1136
      %v1141 = vpack.c.bf16 %v1137, %v1137
      %v1143 = vsel %vm363, %v1139, 0
      %v1146 = vsel %vm367, %v1140, 0
      %v1149 = vsel %vm367, %v1141, 0
      %1151 = vmatprep.subr.bf16.mxu0 0
      %1152 = vmatpush1.bf16.msra.mxu0 0
      %1153 = vmatprep.subr.bf16.mxu0 0
      %1154 = vmatpush1.bf16.msra.mxu0 0
      %1155 = vmatprep.subr.bf16.mxu0 0
      %1156 = vmatpush1.bf16.msra.mxu0 0
      %1157 = vmatprep.subr.bf16.mxu0 0
      %1158 = vmatpush1.bf16.msra.mxu0 0
      %1159 = vmatprep.subr.bf16.mxu0 0
      %1160 = vmatpush1.bf16.msra.mxu0 0
      %1161 = vmatprep.subr.bf16.mxu0 0
      %1162 = vmatpush1.bf16.msra.mxu0 0
      %1163 = vmatprep.subr.bf16.mxu0 0
      %1164 = vmatpush1.bf16.msra.mxu0 0
      %1165 = vmatprep.subr.bf16.mxu0 %v1149
      %1166 = vmatpush1.bf16.msra.mxu0 %v1146
      %1167 = vmatprep.subr.bf16.mxu0 0
      %1168 = vmatpush2.bf16.msra.mxu0 0
      %1169 = vmatprep.subr.bf16.mxu0 0
      %1170 = vmatpush2.bf16.msra.mxu0 0
      %1171 = vmatprep.subr.bf16.mxu0 0
      %1172 = vmatpush2.bf16.msra.mxu0 0
      %1173 = vmatprep.subr.bf16.mxu0 0
      %1174 = vmatpush2.bf16.msra.mxu0 0
      %1175 = vmatprep.subr.bf16.mxu0 0
      %1176 = vmatpush2.bf16.msra.mxu0 0
      %1177 = vmatprep.subr.bf16.mxu0 0
      %1178 = vmatpush2.bf16.msra.mxu0 0
      %1179 = vmatprep.subr.bf16.mxu0 0
      %1180 = vmatpush2.bf16.msra.mxu0 0
      %1181 = vmatprep.subr.bf16.mxu0 0
      %1182 = vmatpush2.bf16.msra.mxu0 0
      %1183 = vmatprep.mubr.bf16.mxu0 0
      %1184 = vmatmul.mubr.bf16.gmra.mxu0 %v1143
      %v1185 = vpop.f32.mrf.mxu0
      %v1186 = vadd.f32 0.0, %v1185
      %v1187 = vpop.f32.mrf.mxu0
      %v1188 = vadd.f32 0.0, %v1187
      %v1189 = vpop.f32.mrf.mxu0
      %v1190 = vpop.f32.mrf.mxu0
      %1191 = vdwg.mxu0
      %v1192 = vadd.f32 %v1124, %v1186
      %v1193 = vadd.f32 %v1126, %v1188
      %1194 = vrot.lane.b32.xlu0 %v1005, 1
      %v1195 = vpop.permute.xlu0 %1194
      %1196 = vrot.lane.b32.xlu0 %v1006, 1
      %v1197 = vpop.permute.xlu0 %1196
      %v1198 = vsel %vm547, %v1195, %v1197
      %v1199 = vsel %vm547, %v1197, %v1195
      %v1200 = vmul.f32 %v1199, %v556
      %v1201 = vmul.f32 %v1198, %v560
      %s1202 = scalar_lea.vmem %s2, 6
      %v1203 = vld [vmem:[%s1202] sm:$0x3]
      %v1204 = vpack.c.bf16 %v1200, %v1200
      %v1205 = vpack.c.bf16 %v1201, %v1201
      %v1207 = vsel %vm363, %v1203, 0
      %v1210 = vsel %vm367, %v1204, 0
      %v1213 = vsel %vm367, %v1205, 0
      %1215 = vmatprep.subr.bf16.mxu0 0
      %1216 = vmatpush1.bf16.msra.mxu0 0
      %1217 = vmatprep.subr.bf16.mxu0 0
      %1218 = vmatpush1.bf16.msra.mxu0 0
      %1219 = vmatprep.subr.bf16.mxu0 0
      %1220 = vmatpush1.bf16.msra.mxu0 0
      %1221 = vmatprep.subr.bf16.mxu0 0
      %1222 = vmatpush1.bf16.msra.mxu0 0
      %1223 = vmatprep.subr.bf16.mxu0 0
      %1224 = vmatpush1.bf16.msra.mxu0 0
      %1225 = vmatprep.subr.bf16.mxu0 0
      %1226 = vmatpush1.bf16.msra.mxu0 0
      %1227 = vmatprep.subr.bf16.mxu0 0
      %1228 = vmatpush1.bf16.msra.mxu0 0
      %1229 = vmatprep.subr.bf16.mxu0 %v1213
      %1230 = vmatpush1.bf16.msra.mxu0 %v1210
      %1231 = vmatprep.subr.bf16.mxu0 0
      %1232 = vmatpush2.bf16.msra.mxu0 0
      %1233 = vmatprep.subr.bf16.mxu0 0
      %1234 = vmatpush2.bf16.msra.mxu0 0
      %1235 = vmatprep.subr.bf16.mxu0 0
      %1236 = vmatpush2.bf16.msra.mxu0 0
      %1237 = vmatprep.subr.bf16.mxu0 0
      %1238 = vmatpush2.bf16.msra.mxu0 0
      %1239 = vmatprep.subr.bf16.mxu0 0
      %1240 = vmatpush2.bf16.msra.mxu0 0
      %1241 = vmatprep.subr.bf16.mxu0 0
      %1242 = vmatpush2.bf16.msra.mxu0 0
      %1243 = vmatprep.subr.bf16.mxu0 0
      %1244 = vmatpush2.bf16.msra.mxu0 0
      %1245 = vmatprep.subr.bf16.mxu0 0
      %1246 = vmatpush2.bf16.msra.mxu0 0
      %1247 = vmatprep.mubr.bf16.mxu0 0
      %1248 = vmatmul.mubr.bf16.gmra.mxu0 %v1207
      %v1249 = vpop.f32.mrf.mxu0
      %v1250 = vadd.f32 0.0, %v1249
      %v1251 = vpop.f32.mrf.mxu0
      %v1252 = vadd.f32 0.0, %v1251
      %v1253 = vpop.f32.mrf.mxu0
      %v1254 = vpop.f32.mrf.mxu0
      %1255 = vdwg.mxu0
      %v1256 = vadd.f32 %v1192, %v1250
      %v1257 = vadd.f32 %v1193, %v1252
      %s1258 = scalar_lea.vmem %s2, 8
      %v1259 = vld [vmem:[%s1258] sm:$0x3]
      %v1260 = vpack.c.bf16 %v1005, %v1005
      %v1261 = vpack.c.bf16 %v1006, %v1006
      %v1263 = vsel %vm363, %v1259, 0
      %v1266 = vsel %vm367, %v1260, 0
      %v1269 = vsel %vm367, %v1261, 0
      %1271 = vmatprep.subr.bf16.mxu0 0
      %1272 = vmatpush1.bf16.msra.mxu0 0
      %1273 = vmatprep.subr.bf16.mxu0 0
      %1274 = vmatpush1.bf16.msra.mxu0 0
      %1275 = vmatprep.subr.bf16.mxu0 0
      %1276 = vmatpush1.bf16.msra.mxu0 0
      %1277 = vmatprep.subr.bf16.mxu0 0
      %1278 = vmatpush1.bf16.msra.mxu0 0
      %1279 = vmatprep.subr.bf16.mxu0 0
      %1280 = vmatpush1.bf16.msra.mxu0 0
      %1281 = vmatprep.subr.bf16.mxu0 0
      %1282 = vmatpush1.bf16.msra.mxu0 0
      %1283 = vmatprep.subr.bf16.mxu0 0
      %1284 = vmatpush1.bf16.msra.mxu0 0
      %1285 = vmatprep.subr.bf16.mxu0 %v1269
      %1286 = vmatpush1.bf16.msra.mxu0 %v1266
      %1287 = vmatprep.subr.bf16.mxu0 0
      %1288 = vmatpush2.bf16.msra.mxu0 0
      %1289 = vmatprep.subr.bf16.mxu0 0
      %1290 = vmatpush2.bf16.msra.mxu0 0
      %1291 = vmatprep.subr.bf16.mxu0 0
      %1292 = vmatpush2.bf16.msra.mxu0 0
      %1293 = vmatprep.subr.bf16.mxu0 0
      %1294 = vmatpush2.bf16.msra.mxu0 0
      %1295 = vmatprep.subr.bf16.mxu0 0
      %1296 = vmatpush2.bf16.msra.mxu0 0
      %1297 = vmatprep.subr.bf16.mxu0 0
      %1298 = vmatpush2.bf16.msra.mxu0 0
      %1299 = vmatprep.subr.bf16.mxu0 0
      %1300 = vmatpush2.bf16.msra.mxu0 0
      %1301 = vmatprep.subr.bf16.mxu0 0
      %1302 = vmatpush2.bf16.msra.mxu0 0
      %1303 = vmatprep.mubr.bf16.mxu0 0
      %1304 = vmatmul.mubr.bf16.gmra.mxu0 %v1263
      %v1305 = vpop.f32.mrf.mxu0
      %v1306 = vadd.f32 0.0, %v1305
      %v1307 = vpop.f32.mrf.mxu0
      %v1308 = vadd.f32 0.0, %v1307
      %v1309 = vpop.f32.mrf.mxu0
      %v1310 = vpop.f32.mrf.mxu0
      %1311 = vdwg.mxu0
      %v1312 = vadd.f32 %v1256, %v1306
      %v1313 = vadd.f32 %v1257, %v1308
      %1314 = vrot.lane.b32.xlu0 %v1005, 127
      %v1315 = vpop.permute.xlu0 %1314
      %1316 = vrot.lane.b32.xlu0 %v1006, 127
      %v1317 = vpop.permute.xlu0 %1316
      %v1318 = vsel %vm681, %v1315, %v1317
      %v1319 = vsel %vm681, %v1317, %v1315
      %v1320 = vmul.f32 %v1318, %v690
      %v1321 = vmul.f32 %v1319, %v694
      %s1322 = scalar_lea.vmem %s2, 10
      %v1323 = vld [vmem:[%s1322] sm:$0x3]
      %v1324 = vpack.c.bf16 %v1320, %v1320
      %v1325 = vpack.c.bf16 %v1321, %v1321
      %v1327 = vsel %vm363, %v1323, 0
      %v1330 = vsel %vm367, %v1324, 0
      %v1333 = vsel %vm367, %v1325, 0
      %1335 = vmatprep.subr.bf16.mxu0 0
      %1336 = vmatpush1.bf16.msra.mxu0 0
      %1337 = vmatprep.subr.bf16.mxu0 0
      %1338 = vmatpush1.bf16.msra.mxu0 0
      %1339 = vmatprep.subr.bf16.mxu0 0
      %1340 = vmatpush1.bf16.msra.mxu0 0
      %1341 = vmatprep.subr.bf16.mxu0 0
      %1342 = vmatpush1.bf16.msra.mxu0 0
      %1343 = vmatprep.subr.bf16.mxu0 0
      %1344 = vmatpush1.bf16.msra.mxu0 0
      %1345 = vmatprep.subr.bf16.mxu0 0
      %1346 = vmatpush1.bf16.msra.mxu0 0
      %1347 = vmatprep.subr.bf16.mxu0 0
      %1348 = vmatpush1.bf16.msra.mxu0 0
      %1349 = vmatprep.subr.bf16.mxu0 %v1333
      %1350 = vmatpush1.bf16.msra.mxu0 %v1330
      %1351 = vmatprep.subr.bf16.mxu0 0
      %1352 = vmatpush2.bf16.msra.mxu0 0
      %1353 = vmatprep.subr.bf16.mxu0 0
      %1354 = vmatpush2.bf16.msra.mxu0 0
      %1355 = vmatprep.subr.bf16.mxu0 0
      %1356 = vmatpush2.bf16.msra.mxu0 0
      %1357 = vmatprep.subr.bf16.mxu0 0
      %1358 = vmatpush2.bf16.msra.mxu0 0
      %1359 = vmatprep.subr.bf16.mxu0 0
      %1360 = vmatpush2.bf16.msra.mxu0 0
      %1361 = vmatprep.subr.bf16.mxu0 0
      %1362 = vmatpush2.bf16.msra.mxu0 0
      %1363 = vmatprep.subr.bf16.mxu0 0
      %1364 = vmatpush2.bf16.msra.mxu0 0
      %1365 = vmatprep.subr.bf16.mxu0 0
      %1366 = vmatpush2.bf16.msra.mxu0 0
      %1367 = vmatprep.mubr.bf16.mxu0 0
      %1368 = vmatmul.mubr.bf16.gmra.mxu0 %v1327
      %v1369 = vpop.f32.mrf.mxu0
      %v1370 = vadd.f32 0.0, %v1369
      %v1371 = vpop.f32.mrf.mxu0
      %v1372 = vadd.f32 0.0, %v1371
      %v1373 = vpop.f32.mrf.mxu0
      %v1374 = vpop.f32.mrf.mxu0
      %1375 = vdwg.mxu0
      %v1376 = vadd.f32 %v1312, %v1370
      %v1377 = vadd.f32 %v1313, %v1372
      %1378 = vrot.lane.b32.xlu0 %v1005, 113
      %v1379 = vpop.permute.xlu0 %1378
      %1380 = vrot.lane.b32.xlu0 %v1006, 113
      %v1381 = vpop.permute.xlu0 %1380
      %v1382 = vsel %vm759, %v1379, %v1381
      %v1383 = vsel %vm759, %v1381, %v1379
      %v1384 = vmul.f32 %v1382, %v768
      %v1385 = vmul.f32 %v1383, %v772
      %s1386 = scalar_lea.vmem %s2, 12
      %v1387 = vld [vmem:[%s1386] sm:$0x3]
      %v1388 = vpack.c.bf16 %v1384, %v1384
      %v1389 = vpack.c.bf16 %v1385, %v1385
      %v1391 = vsel %vm363, %v1387, 0
      %v1394 = vsel %vm367, %v1388, 0
      %v1397 = vsel %vm367, %v1389, 0
      %1399 = vmatprep.subr.bf16.mxu0 0
      %1400 = vmatpush1.bf16.msra.mxu0 0
      %1401 = vmatprep.subr.bf16.mxu0 0
      %1402 = vmatpush1.bf16.msra.mxu0 0
      %1403 = vmatprep.subr.bf16.mxu0 0
      %1404 = vmatpush1.bf16.msra.mxu0 0
      %1405 = vmatprep.subr.bf16.mxu0 0
      %1406 = vmatpush1.bf16.msra.mxu0 0
      %1407 = vmatprep.subr.bf16.mxu0 0
      %1408 = vmatpush1.bf16.msra.mxu0 0
      %1409 = vmatprep.subr.bf16.mxu0 0
      %1410 = vmatpush1.bf16.msra.mxu0 0
      %1411 = vmatprep.subr.bf16.mxu0 0
      %1412 = vmatpush1.bf16.msra.mxu0 0
      %1413 = vmatprep.subr.bf16.mxu0 %v1397
      %1414 = vmatpush1.bf16.msra.mxu0 %v1394
      %1415 = vmatprep.subr.bf16.mxu0 0
      %1416 = vmatpush2.bf16.msra.mxu0 0
      %1417 = vmatprep.subr.bf16.mxu0 0
      %1418 = vmatpush2.bf16.msra.mxu0 0
      %1419 = vmatprep.subr.bf16.mxu0 0
      %1420 = vmatpush2.bf16.msra.mxu0 0
      %1421 = vmatprep.subr.bf16.mxu0 0
      %1422 = vmatpush2.bf16.msra.mxu0 0
      %1423 = vmatprep.subr.bf16.mxu0 0
      %1424 = vmatpush2.bf16.msra.mxu0 0
      %1425 = vmatprep.subr.bf16.mxu0 0
      %1426 = vmatpush2.bf16.msra.mxu0 0
      %1427 = vmatprep.subr.bf16.mxu0 0
      %1428 = vmatpush2.bf16.msra.mxu0 0
      %1429 = vmatprep.subr.bf16.mxu0 0
      %1430 = vmatpush2.bf16.msra.mxu0 0
      %1431 = vmatprep.mubr.bf16.mxu0 0
      %1432 = vmatmul.mubr.bf16.gmra.mxu0 %v1391
      %v1433 = vpop.f32.mrf.mxu0
      %v1434 = vadd.f32 0.0, %v1433
      %v1435 = vpop.f32.mrf.mxu0
      %v1436 = vadd.f32 0.0, %v1435
      %v1437 = vpop.f32.mrf.mxu0
      %v1438 = vpop.f32.mrf.mxu0
      %1439 = vdwg.mxu0
      %v1440 = vadd.f32 %v1376, %v1434
      %v1441 = vadd.f32 %v1377, %v1436
      %1442 = vrot.lane.b32.xlu0 %v1005, 112
      %v1443 = vpop.permute.xlu0 %1442
      %1444 = vrot.lane.b32.xlu0 %v1006, 112
      %v1445 = vpop.permute.xlu0 %1444
      %v1446 = vsel %vm837, %v1443, %v1445
      %v1447 = vsel %vm837, %v1445, %v1443
      %v1448 = vmul.f32 %v1446, %v846
      %v1449 = vmul.f32 %v1447, %v850
      %s1450 = scalar_lea.vmem %s2, 14
      %v1451 = vld [vmem:[%s1450] sm:$0x3]
      %v1452 = vpack.c.bf16 %v1448, %v1448
      %v1453 = vpack.c.bf16 %v1449, %v1449
      %v1455 = vsel %vm363, %v1451, 0
      %v1458 = vsel %vm367, %v1452, 0
      %v1461 = vsel %vm367, %v1453, 0
      %1463 = vmatprep.subr.bf16.mxu0 0
      %1464 = vmatpush1.bf16.msra.mxu0 0
      %1465 = vmatprep.subr.bf16.mxu0 0
      %1466 = vmatpush1.bf16.msra.mxu0 0
      %1467 = vmatprep.subr.bf16.mxu0 0
      %1468 = vmatpush1.bf16.msra.mxu0 0
      %1469 = vmatprep.subr.bf16.mxu0 0
      %1470 = vmatpush1.bf16.msra.mxu0 0
      %1471 = vmatprep.subr.bf16.mxu0 0
      %1472 = vmatpush1.bf16.msra.mxu0 0
      %1473 = vmatprep.subr.bf16.mxu0 0
      %1474 = vmatpush1.bf16.msra.mxu0 0
      %1475 = vmatprep.subr.bf16.mxu0 0
      %1476 = vmatpush1.bf16.msra.mxu0 0
      %1477 = vmatprep.subr.bf16.mxu0 %v1461
      %1478 = vmatpush1.bf16.msra.mxu0 %v1458
      %1479 = vmatprep.subr.bf16.mxu0 0
      %1480 = vmatpush2.bf16.msra.mxu0 0
      %1481 = vmatprep.subr.bf16.mxu0 0
      %1482 = vmatpush2.bf16.msra.mxu0 0
      %1483 = vmatprep.subr.bf16.mxu0 0
      %1484 = vmatpush2.bf16.msra.mxu0 0
      %1485 = vmatprep.subr.bf16.mxu0 0
      %1486 = vmatpush2.bf16.msra.mxu0 0
      %1487 = vmatprep.subr.bf16.mxu0 0
      %1488 = vmatpush2.bf16.msra.mxu0 0
      %1489 = vmatprep.subr.bf16.mxu0 0
      %1490 = vmatpush2.bf16.msra.mxu0 0
      %1491 = vmatprep.subr.bf16.mxu0 0
      %1492 = vmatpush2.bf16.msra.mxu0 0
      %1493 = vmatprep.subr.bf16.mxu0 0
      %1494 = vmatpush2.bf16.msra.mxu0 0
      %1495 = vmatprep.mubr.bf16.mxu0 0
      %1496 = vmatmul.mubr.bf16.gmra.mxu0 %v1455
      %v1497 = vpop.f32.mrf.mxu0
      %v1498 = vadd.f32 0.0, %v1497
      %v1499 = vpop.f32.mrf.mxu0
      %v1500 = vadd.f32 0.0, %v1499
      %v1501 = vpop.f32.mrf.mxu0
      %v1502 = vpop.f32.mrf.mxu0
      %1503 = vdwg.mxu0
      %v1504 = vadd.f32 %v1440, %v1498
      %v1505 = vadd.f32 %v1441, %v1500
      %1506 = vrot.lane.b32.xlu0 %v1005, 111
      %v1507 = vpop.permute.xlu0 %1506
      %1508 = vrot.lane.b32.xlu0 %v1006, 111
      %v1509 = vpop.permute.xlu0 %1508
      %v1510 = vsel %vm915, %v1507, %v1509
      %v1511 = vsel %vm915, %v1509, %v1507
      %v1512 = vmul.f32 %v1510, %v924
      %v1513 = vmul.f32 %v1511, %v928
      %s1514 = scalar_lea.vmem %s2, 16
      %v1515 = vld [vmem:[%s1514] sm:$0x3]
      %v1516 = vpack.c.bf16 %v1512, %v1512
      %v1517 = vpack.c.bf16 %v1513, %v1513
      %v1519 = vsel %vm363, %v1515, 0
      %v1522 = vsel %vm367, %v1516, 0
      %v1525 = vsel %vm367, %v1517, 0
      %1527 = vmatprep.subr.bf16.mxu0 0
      %1528 = vmatpush1.bf16.msra.mxu0 0
      %1529 = vmatprep.subr.bf16.mxu0 0
      %1530 = vmatpush1.bf16.msra.mxu0 0
      %1531 = vmatprep.subr.bf16.mxu0 0
      %1532 = vmatpush1.bf16.msra.mxu0 0
      %1533 = vmatprep.subr.bf16.mxu0 0
      %1534 = vmatpush1.bf16.msra.mxu0 0
      %1535 = vmatprep.subr.bf16.mxu0 0
      %1536 = vmatpush1.bf16.msra.mxu0 0
      %1537 = vmatprep.subr.bf16.mxu0 0
      %1538 = vmatpush1.bf16.msra.mxu0 0
      %1539 = vmatprep.subr.bf16.mxu0 0
      %1540 = vmatpush1.bf16.msra.mxu0 0
      %1541 = vmatprep.subr.bf16.mxu0 %v1525
      %1542 = vmatpush1.bf16.msra.mxu0 %v1522
      %1543 = vmatprep.subr.bf16.mxu0 0
      %1544 = vmatpush2.bf16.msra.mxu0 0
      %1545 = vmatprep.subr.bf16.mxu0 0
      %1546 = vmatpush2.bf16.msra.mxu0 0
      %1547 = vmatprep.subr.bf16.mxu0 0
      %1548 = vmatpush2.bf16.msra.mxu0 0
      %1549 = vmatprep.subr.bf16.mxu0 0
      %1550 = vmatpush2.bf16.msra.mxu0 0
      %1551 = vmatprep.subr.bf16.mxu0 0
      %1552 = vmatpush2.bf16.msra.mxu0 0
      %1553 = vmatprep.subr.bf16.mxu0 0
      %1554 = vmatpush2.bf16.msra.mxu0 0
      %1555 = vmatprep.subr.bf16.mxu0 0
      %1556 = vmatpush2.bf16.msra.mxu0 0
      %1557 = vmatprep.subr.bf16.mxu0 0
      %1558 = vmatpush2.bf16.msra.mxu0 0
      %1559 = vmatprep.mubr.bf16.mxu0 0
      %1560 = vmatmul.mubr.bf16.gmra.mxu0 %v1519
      %v1561 = vpop.f32.mrf.mxu0
      %v1562 = vadd.f32 0.0, %v1561
      %v1563 = vpop.f32.mrf.mxu0
      %v1564 = vadd.f32 0.0, %v1563
      %v1565 = vpop.f32.mrf.mxu0
      %v1566 = vpop.f32.mrf.mxu0
      %1567 = vdwg.mxu0
      %v1568 = vadd.f32 %v1504, %v1562
      %v1569 = vadd.f32 %v1505, %v1564
      %v1570 = vld [vmem:[%s6] sm:$0xf]
      %1572 = vset.pattern.permute.xlu0 0
      %1573 = vperm.xlu0 %1572, %v1570
      %v1574 = vpop.permute.xlu0 %1573
      %v1576 = vmul.f32 %v1568, %v1574
      %v1577 = vmul.f32 %v1569, %v1574
      %v1578 = vld [vmem:[%s7] sm:$0xf]
      %1580 = vset.pattern.permute.xlu0 0
      %1581 = vperm.xlu0 %1580, %v1578
      %v1582 = vpop.permute.xlu0 %1581
      %v1584 = vadd.f32 %v1576, %v1582
      %v1585 = vadd.f32 %v1577, %v1582
      %v1586 = vadd.f32 %v1584, %v307
      %v1587 = vadd.f32 %v1585, %v309
      %v1588 = vmax.f32 %v1586, 0.0
      %v1589 = vmax.f32 %v1587, 0.0
      %v1592 = vcombine.low %v1588, %v1589
      %1594 = vst [vmem:[%s305] sm:$0xff] %v1592
      %p1595 = scmp.lt.s32.totalorder %s19, 1
      %s1596 = scalar_select %p1595, %s19, 1
      %s1597 = smul.addr %s1596, 2
      %s1598 = smul.addr %s1597, 4
      %s1599 = scalar_lea.vmem %s8, %s1598
      // Predicated region
      $region53: #{basic_block_forward.1} parent=51 // pred_check
        %p1600 = pneg %p210
      $region54: #{basic_block_forward.1} parent=51 // pred_check_branch
        %1602 = sbr.rel (%p1600) target = $region56
      $region55: #{basic_block_forward.1} parent=51 // pred_region
        _
      $region56: #{basic_block_forward.1} parent=51 // pred_fallthru
        _
    $region52: #{basic_block_forward.1} parent=5 // pred_fallthru
      _
    %p1603 = scmp.le.s32.totalorder 2, %s14
    // Predicated region
    $region57: #{basic_block_forward.1} parent=5 // pred_check
      %p1604 = pneg %p1603
    $region58: #{basic_block_forward.1} parent=5 // pred_check_branch
      %1606 = sbr.rel (%p1604) target = $region60
    $region59: #{basic_block_forward.1} parent=5 // pred_region
      %s1607 = ssub.s32 %s14, 2
      // Predicated region
      $region61: #{basic_block_forward.1} parent=59 // pred_check
        %p1608 = pneg %p216
      $region62: #{basic_block_forward.1} parent=59 // pred_check_branch
        %1610 = sbr.rel (%p1608) target = $region64
      $region63: #{basic_block_forward.1} parent=59 // pred_region
        %p1611 = scmp.lt.s32.totalorder %s20, 1
        %s1612 = scalar_select %p1611, %s20, 1
        %s1613 = smul.addr %s1612, 2
        %s1614 = smul.addr %s1613, 4
        %s1615 = scalar_lea.vmem %s8, %s1614
      $region64: #{basic_block_forward.1} parent=59 // pred_fallthru
        _
    $region60: #{basic_block_forward.1} parent=5 // pred_fallthru
      _
  $region6: #{basic_block_forward.1} parent=0 // loop_footer
    %s18 = sadd.s32 1, %s14
  $region7: #{basic_block_forward.1} parent=0 // loop_footer_branch
    %13 = sbr.rel target = $region3
  $region8: #{basic_block_forward.1} parent=0 // loop_exit
    _

</llo_original>
